<compile_context>
chip_gen: v6e
topology: v6e:2x2x1
jax: 0.10.0
libtpu: 0.0.40
codegen_flags: <defaults>
</compile_context>

<pallas_src>
import jax
import jax.numpy as jnp
from jax.experimental import pallas as pl
from jax.experimental.pallas import tpu as pltpu


def _round_up(x, m):
    return ((x + m - 1) // m) * m


def _default_elementwise_dtype():
    """bf16 VPU/EUP exists on v6e/v7x; keep f32 elementwise on older gens."""
    kind = jax.devices()[0].device_kind.lower()
    if "v6" in kind or "v7" in kind:
        return jnp.bfloat16
    return jnp.float32


# ----------------------------------------------------------------------------
# Kernel factory: one batch tile of the full MLP (6 linears, tanh between the
# first 5).  All feature dims are zero-padded to P=128 lanes; padded columns
# stay exactly zero through the whole chain (zero weights, zero biases,
# tanh(0)=0), so no masking is needed and the output store is lane-dense.
# ----------------------------------------------------------------------------
def _make_policy_kernel(matmul_dtype, elementwise_dtype):
    mm, ew = matmul_dtype, elementwise_dtype

    def kernel(x_ref, w1_ref, ws_ref, bs_ref, out_ref):
        # Layer 1: (tb, in_dim) @ (in_dim, P) -> (tb, P), f32 MXU accumulation.
        h = x_ref[...].astype(mm)
        y = jnp.dot(h, w1_ref[...], preferred_element_type=jnp.float32)
        h = jnp.tanh(y.astype(ew) + bs_ref[0].astype(ew))

        # Layers 2..5 from the stacked (5, P, P) weight slab.
        for i in range(4):
            y = jnp.dot(h.astype(mm), ws_ref[i],
                        preferred_element_type=jnp.float32)
            h = jnp.tanh(y.astype(ew) + bs_ref[i + 1].astype(ew))

        # Layer 6 (output head, no tanh): bias-add in f32, lane-dense store.
        y = jnp.dot(h.astype(mm), ws_ref[4],
                    preferred_element_type=jnp.float32)
        out_ref[...] = (y + bs_ref[5].astype(jnp.float32)).astype(out_ref.dtype)

    return kernel


def policy_network_forward(x, params, *, block_batch=2048,
                           matmul_dtype=jnp.bfloat16,
                           elementwise_dtype=None):
    """x: (batch, input_dim).  Returns (action_mean, action_logstd), f32."""
    batch, in_dim = x.shape
    out_dim = params["w6"].shape[1]

    if elementwise_dtype is None:
        elementwise_dtype = _default_elementwise_dtype()

    # Lane-dense feature width for every hidden/output activation.
    P = _round_up(max(64, out_dim), 128)

    # --- batch tile -----------------------------------------------------
    padded8 = _round_up(batch, 8)
    tb = min(block_batch, padded8)
    # Ensure >= 2 grid steps when the batch allows, so both v7x TCs get work.
    if pl.cdiv(batch, tb) < 2 and padded8 >= 16:
        tb = _round_up((padded8 + 1) // 2, 8)
    grid = (pl.cdiv(batch, tb),)

    # --- pack parameters into 3 resident buffers -------------------------
    mm = matmul_dtype
    hidden = [64, 64, 32, 32, 64, out_dim]          # output width of each layer

    w1 = jnp.zeros((in_dim, P), mm).at[:, :64].set(params["w1"].astype(mm))

    ws = jnp.zeros((5, P, P), mm)
    layer_shapes = [(64, 64), (64, 32), (32, 32), (32, 64), (64, out_dim)]
    for idx, (d_in, d_out) in enumerate(layer_shapes):
        ws = ws.at[idx, :d_in, :d_out].set(params[f"w{idx + 2}"].astype(mm))

    bs = jnp.zeros((6, 1, P), jnp.float32)
    for idx, d_out in enumerate(hidden):
        bs = bs.at[idx, :, :d_out].set(params[f"b{idx + 1}"].astype(jnp.float32))

    # x enters the kernel already in the matmul dtype (half the HBM read).
    # TODO(synk): for raw, un-normalized large-magnitude observations keep x
    # in f32 here (pass matmul_dtype=jnp.float32) to avoid bf16 mantissa loss.
    x_in = x.astype(mm)

    # --- cost estimate ----------------------------------------------------
    flops = 2 * batch * (in_dim * 64 + 64 * 64 + 64 * 32 + 32 * 32
                         + 32 * 64 + 64 * out_dim)
    transcendentals = batch * (64 + 64 + 32 + 32 + 64)
    bytes_accessed = int(
        x_in.size * x_in.dtype.itemsize
        + batch * P * 4
        + w1.size * w1.dtype.itemsize
        + ws.size * ws.dtype.itemsize
        + bs.size * bs.dtype.itemsize)

    kernel = _make_policy_kernel(mm, elementwise_dtype)

    out = pl.pallas_call(
        kernel,
        out_shape=jax.ShapeDtypeStruct((batch, P), jnp.float32),
        grid=grid,
        in_specs=[
            pl.BlockSpec((tb, in_dim), lambda i: (i, 0)),        # x tile
            pl.BlockSpec((in_dim, P), lambda i: (0, 0)),         # w1 (resident)
            pl.BlockSpec((5, P, P), lambda i: (0, 0, 0)),        # w2..w6 slab
            pl.BlockSpec((6, 1, P), lambda i: (0, 0, 0)),        # bias slab
        ],
        out_specs=pl.BlockSpec((tb, P), lambda i: (i, 0)),
        compiler_params=pltpu.CompilerParams(
            dimension_semantics=("parallel",)),
        cost_estimate=pl.CostEstimate(
            flops=flops, transcendentals=transcendentals,
            bytes_accessed=bytes_accessed),
    )(x_in, w1, ws, bs)

    mean = out[:, :out_dim]
    # actor_logstd.expand_as(action_mean): constant row, broadcast outside the
    # kernel (no reason to write B identical copies from the TensorCore).
    logstd = jnp.broadcast_to(params["logstd"].astype(jnp.float32), mean.shape)
    return mean, logstd


# ----------------------------------------------------------------------------
# Deterministic parameter construction (mirrors layer_init: orthogonal weight
# with gain=sqrt(2) (1.0 for the last layer), zero bias, zero actor_logstd).
# Weights are stored (in_features, out_features) so y = x @ W + b.
# ----------------------------------------------------------------------------
def init_params(key, input_dim, output_dim):
    dims = [input_dim, 64, 64, 32, 32, 64, output_dim]
    gains = [jnp.sqrt(2.0)] * 5 + [1.0]
    params = {}
    keys = jax.random.split(key, 6)
    for i, (d_in, d_out, gain, k) in enumerate(
        zip(dims[:-1], dims[1:], gains, keys), start=1
    ):
        w = jax.nn.initializers.orthogonal(scale=gain)(k, (d_in, d_out), jnp.float32)
        params[f"w{i}"] = w
        params[f"b{i}"] = jnp.zeros((1, d_out), jnp.float32)
    params["logstd"] = jnp.zeros((1, output_dim), jnp.float32)
    return params


def _reference_forward(x, params, matmul_dtype=jnp.float32,
                       elementwise_dtype=jnp.float32):
    mm, ew = matmul_dtype, elementwise_dtype
    h = x.astype(mm)
    for i in range(1, 6):
        y = jnp.dot(h.astype(mm), params[f"w{i}"].astype(mm),
                    preferred_element_type=jnp.float32)
        h = jnp.tanh(y.astype(ew) + params[f"b{i}"].astype(ew))
    y = jnp.dot(h.astype(mm), params["w6"].astype(mm),
                preferred_element_type=jnp.float32)
    mean = (y + params["b6"].astype(jnp.float32)).astype(jnp.float32)
    logstd = jnp.broadcast_to(params["logstd"], mean.shape)
    return mean, logstd


if __name__ == "__main__":
    batch, input_dim, output_dim = 512, 16, 4

    key = jax.random.PRNGKey(0)
    k_param, k_x = jax.random.split(key)
    params = init_params(k_param, input_dim, output_dim)
    x = jax.random.normal(k_x, (batch, input_dim), jnp.float32)

    ew_dtype = _default_elementwise_dtype()
    mean, logstd = policy_network_forward(
        x, params, block_batch=2048,
        matmul_dtype=jnp.bfloat16, elementwise_dtype=ew_dtype)
    jax.block_until_ready((mean, logstd))

    # Matched-dtype reference (same bf16 matmul / elementwise chain) and the
    # pure-f32 reference (loose sanity check on bf16 rounding).
    ref_mean_matched, ref_logstd = _reference_forward(
        x, params, matmul_dtype=jnp.bfloat16, elementwise_dtype=ew_dtype)
    ref_mean_f32, _ = _reference_forward(
        x, params, matmul_dtype=jnp.float32, elementwise_dtype=jnp.float32)

    assert mean.shape == (batch, output_dim)
    assert logstd.shape == (batch, output_dim)
    assert jnp.allclose(mean, ref_mean_matched, atol=5e-2, rtol=5e-2)
    assert jnp.allclose(mean, ref_mean_f32, atol=1e-1, rtol=1e-1)
    assert jnp.allclose(logstd, ref_logstd)

    print("KERNEL_OK")
</pallas_src>

<mosaic_0001>
module attributes {stable_mosaic.version = 11 : i64} {
  func.func @kernel(%arg0: i32, %arg1: memref<256x16xbf16, #tpu.memory_space<vmem>>, %arg2: memref<16x128xbf16, #tpu.memory_space<vmem>>, %arg3: memref<5x128x128xbf16, #tpu.memory_space<vmem>>, %arg4: memref<6x1x128xf32, #tpu.memory_space<vmem>>, %arg5: memref<256x128xf32, #tpu.memory_space<vmem>>) attributes {dimension_semantics = [#tpu.dimension_semantics<parallel>], iteration_bounds = array<i64: 2>, scalar_prefetch = 0 : i64, scratch_operands = 0 : i64, tpu.core_type = #tpu.core_type<tc>, window_params = [{transform_indices = @transform_0, window_bounds = array<i64: 256, 16>}, {pipeline_mode = #tpu.pipeline_mode<synchronous>, transform_indices = @transform_1, window_bounds = array<i64: 16, 128>}, {pipeline_mode = #tpu.pipeline_mode<synchronous>, transform_indices = @transform_2, window_bounds = array<i64: 5, 128, 128>}, {pipeline_mode = #tpu.pipeline_mode<synchronous>, transform_indices = @transform_3, window_bounds = array<i64: 6, 1, 128>}, {transform_indices = @transform_4, window_bounds = array<i64: 256, 128>}]} {
    %c0 = arith.constant 0 : index
    %c0_0 = arith.constant 0 : index
    %0 = vector.load %arg1[%c0, %c0_0] : memref<256x16xbf16, #tpu.memory_space<vmem>>, vector<256x16xbf16>
    %c0_1 = arith.constant 0 : index
    %c0_2 = arith.constant 0 : index
    %1 = vector.load %arg2[%c0_1, %c0_2] : memref<16x128xbf16, #tpu.memory_space<vmem>>, vector<16x128xbf16>
    %cst = arith.constant dense<0.000000e+00> : vector<256x128xf32>
    %2 = tpu.matmul %0, %1, %cst {dimension_numbers = #tpu.dot_dimension_numbers<[1], [0], [0], [1], [0, 0, 1, 1], [], []>} : vector<256x16xbf16>, vector<16x128xbf16>, vector<256x128xf32> -> vector<256x128xf32>
    %c0_3 = arith.constant 0 : index
    %c0_4 = arith.constant 0 : index
    %c0_5 = arith.constant 0 : index
    %3 = vector.load %arg4[%c0_3, %c0_4, %c0_5] : memref<6x1x128xf32, #tpu.memory_space<vmem>>, vector<1x1x128xf32>
    %4 = vector.shape_cast %3 : vector<1x1x128xf32> to vector<1x128xf32>
    %5 = vector.broadcast %4 : vector<1x128xf32> to vector<256x128xf32>
    %6 = arith.addf %2, %5 : vector<256x128xf32>
    %7 = math.tanh %6 : vector<256x128xf32>
    %8 = arith.truncf %7 : vector<256x128xf32> to vector<256x128xbf16>
    %c0_6 = arith.constant 0 : index
    %c0_7 = arith.constant 0 : index
    %c0_8 = arith.constant 0 : index
    %9 = vector.load %arg3[%c0_6, %c0_7, %c0_8] : memref<5x128x128xbf16, #tpu.memory_space<vmem>>, vector<1x128x128xbf16>
    %10 = vector.shape_cast %9 : vector<1x128x128xbf16> to vector<128x128xbf16>
    %cst_9 = arith.constant dense<0.000000e+00> : vector<256x128xf32>
    %11 = tpu.matmul %8, %10, %cst_9 {dimension_numbers = #tpu.dot_dimension_numbers<[1], [0], [0], [1], [0, 0, 1, 1], [], []>} : vector<256x128xbf16>, vector<128x128xbf16>, vector<256x128xf32> -> vector<256x128xf32>
    %c1 = arith.constant 1 : index
    %c0_10 = arith.constant 0 : index
    %c0_11 = arith.constant 0 : index
    %12 = vector.load %arg4[%c1, %c0_10, %c0_11] : memref<6x1x128xf32, #tpu.memory_space<vmem>>, vector<1x1x128xf32>
    %13 = vector.shape_cast %12 : vector<1x1x128xf32> to vector<1x128xf32>
    %14 = vector.broadcast %13 : vector<1x128xf32> to vector<256x128xf32>
    %15 = arith.addf %11, %14 : vector<256x128xf32>
    %16 = math.tanh %15 : vector<256x128xf32>
    %17 = arith.truncf %16 : vector<256x128xf32> to vector<256x128xbf16>
    %c1_12 = arith.constant 1 : index
    %c0_13 = arith.constant 0 : index
    %c0_14 = arith.constant 0 : index
    %18 = vector.load %arg3[%c1_12, %c0_13, %c0_14] : memref<5x128x128xbf16, #tpu.memory_space<vmem>>, vector<1x128x128xbf16>
    %19 = vector.shape_cast %18 : vector<1x128x128xbf16> to vector<128x128xbf16>
    %cst_15 = arith.constant dense<0.000000e+00> : vector<256x128xf32>
    %20 = tpu.matmul %17, %19, %cst_15 {dimension_numbers = #tpu.dot_dimension_numbers<[1], [0], [0], [1], [0, 0, 1, 1], [], []>} : vector<256x128xbf16>, vector<128x128xbf16>, vector<256x128xf32> -> vector<256x128xf32>
    %c2 = arith.constant 2 : index
    %c0_16 = arith.constant 0 : index
    %c0_17 = arith.constant 0 : index
    %21 = vector.load %arg4[%c2, %c0_16, %c0_17] : memref<6x1x128xf32, #tpu.memory_space<vmem>>, vector<1x1x128xf32>
    %22 = vector.shape_cast %21 : vector<1x1x128xf32> to vector<1x128xf32>
    %23 = vector.broadcast %22 : vector<1x128xf32> to vector<256x128xf32>
    %24 = arith.addf %20, %23 : vector<256x128xf32>
    %25 = math.tanh %24 : vector<256x128xf32>
    %26 = arith.truncf %25 : vector<256x128xf32> to vector<256x128xbf16>
    %c2_18 = arith.constant 2 : index
    %c0_19 = arith.constant 0 : index
    %c0_20 = arith.constant 0 : index
    %27 = vector.load %arg3[%c2_18, %c0_19, %c0_20] : memref<5x128x128xbf16, #tpu.memory_space<vmem>>, vector<1x128x128xbf16>
    %28 = vector.shape_cast %27 : vector<1x128x128xbf16> to vector<128x128xbf16>
    %cst_21 = arith.constant dense<0.000000e+00> : vector<256x128xf32>
    %29 = tpu.matmul %26, %28, %cst_21 {dimension_numbers = #tpu.dot_dimension_numbers<[1], [0], [0], [1], [0, 0, 1, 1], [], []>} : vector<256x128xbf16>, vector<128x128xbf16>, vector<256x128xf32> -> vector<256x128xf32>
    %c3 = arith.constant 3 : index
    %c0_22 = arith.constant 0 : index
    %c0_23 = arith.constant 0 : index
    %30 = vector.load %arg4[%c3, %c0_22, %c0_23] : memref<6x1x128xf32, #tpu.memory_space<vmem>>, vector<1x1x128xf32>
    %31 = vector.shape_cast %30 : vector<1x1x128xf32> to vector<1x128xf32>
    %32 = vector.broadcast %31 : vector<1x128xf32> to vector<256x128xf32>
    %33 = arith.addf %29, %32 : vector<256x128xf32>
    %34 = math.tanh %33 : vector<256x128xf32>
    %35 = arith.truncf %34 : vector<256x128xf32> to vector<256x128xbf16>
    %c3_24 = arith.constant 3 : index
    %c0_25 = arith.constant 0 : index
    %c0_26 = arith.constant 0 : index
    %36 = vector.load %arg3[%c3_24, %c0_25, %c0_26] : memref<5x128x128xbf16, #tpu.memory_space<vmem>>, vector<1x128x128xbf16>
    %37 = vector.shape_cast %36 : vector<1x128x128xbf16> to vector<128x128xbf16>
    %cst_27 = arith.constant dense<0.000000e+00> : vector<256x128xf32>
    %38 = tpu.matmul %35, %37, %cst_27 {dimension_numbers = #tpu.dot_dimension_numbers<[1], [0], [0], [1], [0, 0, 1, 1], [], []>} : vector<256x128xbf16>, vector<128x128xbf16>, vector<256x128xf32> -> vector<256x128xf32>
    %c4 = arith.constant 4 : index
    %c0_28 = arith.constant 0 : index
    %c0_29 = arith.constant 0 : index
    %39 = vector.load %arg4[%c4, %c0_28, %c0_29] : memref<6x1x128xf32, #tpu.memory_space<vmem>>, vector<1x1x128xf32>
    %40 = vector.shape_cast %39 : vector<1x1x128xf32> to vector<1x128xf32>
    %41 = vector.broadcast %40 : vector<1x128xf32> to vector<256x128xf32>
    %42 = arith.addf %38, %41 : vector<256x128xf32>
    %43 = math.tanh %42 : vector<256x128xf32>
    %44 = arith.truncf %43 : vector<256x128xf32> to vector<256x128xbf16>
    %c4_30 = arith.constant 4 : index
    %c0_31 = arith.constant 0 : index
    %c0_32 = arith.constant 0 : index
    %45 = vector.load %arg3[%c4_30, %c0_31, %c0_32] : memref<5x128x128xbf16, #tpu.memory_space<vmem>>, vector<1x128x128xbf16>
    %46 = vector.shape_cast %45 : vector<1x128x128xbf16> to vector<128x128xbf16>
    %cst_33 = arith.constant dense<0.000000e+00> : vector<256x128xf32>
    %47 = tpu.matmul %44, %46, %cst_33 {dimension_numbers = #tpu.dot_dimension_numbers<[1], [0], [0], [1], [0, 0, 1, 1], [], []>} : vector<256x128xbf16>, vector<128x128xbf16>, vector<256x128xf32> -> vector<256x128xf32>
    %c5 = arith.constant 5 : index
    %c0_34 = arith.constant 0 : index
    %c0_35 = arith.constant 0 : index
    %48 = vector.load %arg4[%c5, %c0_34, %c0_35] : memref<6x1x128xf32, #tpu.memory_space<vmem>>, vector<1x1x128xf32>
    %49 = vector.shape_cast %48 : vector<1x1x128xf32> to vector<1x128xf32>
    %50 = vector.broadcast %49 : vector<1x128xf32> to vector<256x128xf32>
    %51 = arith.addf %47, %50 : vector<256x128xf32>
    %c0_36 = arith.constant 0 : index
    %c0_37 = arith.constant 0 : index
    %52 = vector.load %arg5[%c0_36, %c0_37] : memref<256x128xf32, #tpu.memory_space<vmem>>, vector<256x128xf32>
    tpu.vector_store %arg5[%c0_36, %c0_37], %51 {strides = array<i32>} : memref<256x128xf32, #tpu.memory_space<vmem>>, vector<256x128xf32>,
    return
  }
  func.func @transform_0(%arg0: i32) -> (i32, i32) {
    %c0_i32 = arith.constant 0 : i32
    %c0_i32_0 = arith.constant 0 : i32
    return %arg0, %c0_i32 : i32, i32
  }
  func.func @transform_1(%arg0: i32) -> (i32, i32) {
    %c0_i32 = arith.constant 0 : i32
    %c0_i32_0 = arith.constant 0 : i32
    %c0_i32_1 = arith.constant 0 : i32
    return %c0_i32, %c0_i32_0 : i32, i32
  }
  func.func @transform_2(%arg0: i32) -> (i32, i32, i32) {
    %c0_i32 = arith.constant 0 : i32
    %c0_i32_0 = arith.constant 0 : i32
    %c0_i32_1 = arith.constant 0 : i32
    %c0_i32_2 = arith.constant 0 : i32
    return %c0_i32, %c0_i32_0, %c0_i32_1 : i32, i32, i32
  }
  func.func @transform_3(%arg0: i32) -> (i32, i32, i32) {
    %c0_i32 = arith.constant 0 : i32
    %c0_i32_0 = arith.constant 0 : i32
    %c0_i32_1 = arith.constant 0 : i32
    %c0_i32_2 = arith.constant 0 : i32
    return %c0_i32, %c0_i32_0, %c0_i32_1 : i32, i32, i32
  }
  func.func @transform_4(%arg0: i32) -> (i32, i32) {
    %c0_i32 = arith.constant 0 : i32
    %c0_i32_0 = arith.constant 0 : i32
    return %arg0, %c0_i32 : i32, i32
  }
}

</mosaic_0001>

<llo_original>
// kernel: tpu_custom_call.1
$region0: #{tpu_custom_call.1}
  #allocation0 [shape = 'u32[]', space=smem, size = 0x4, offset = 0x4, fixed_abs, tag = 'smem constant byte address 0x4 - core index']
  #allocation1 [shape = 'u32[144,128]{1,0:T(1,128)}', space=vmem, size = 0x12000, scoped, tag = 'internal scratch']
  %s0 = inlined_call_operand.vmem [shape: bf16[512,16], index: 0, kind: input, shape index: {}]
  %s1 = inlined_call_operand.vmem [shape: bf16[16,128], index: 1, kind: input, shape index: {}]
  %s2 = inlined_call_operand.hbm [shape: bf16[5,128,128], index: 2, kind: input, shape index: {}]
  %s3 = inlined_call_operand.vmem [shape: f32[6,1,128], index: 3, kind: input, shape index: {}]
  %s4 = inlined_call_operand.hbm [shape: f32[512,128], index: 4, kind: output, shape index: {}]
  %s5 = sld [smem:[#allocation0]]
  $region53: #{tpu_custom_call.1} parent=0
    _
  %s7 = ssub.s32 1, %s5
  %s8 = scalar_select 0, %s7, %s5
  $region1: #{tpu_custom_call.1} parent=0
    #allocation2 [shape = 'u8[163840]{0}', space=vmem, size = 0x28000, scoped, tag = 'input window, operand 2, single buffered']
    #allocation3 [shape = 's32[2]{0}', space=sflag, size = 0x8, scoped, tag = 'scoped memory for tpu_custom_call.1']
    #allocation4 [shape = 's32[2]{0}', space=sflag, size = 0x8, scoped, tag = 'scoped memory for tpu_custom_call.1']
    #allocation5 [shape = 'u8[262144]{0}', space=vmem, size = 0x40000, scoped, tag = 'output window, operand 0']
    %9 = vsyncpa [#allocation3], 0
    %10 = vsyncpa [#allocation4], 0
    %s11 = scalar_lea.sflag [#allocation4], 1
    %12 = vsyncpa %s11, 0
    loop: start=0, step=1, limit=4
    $region2: #{tpu_custom_call.1} parent=1 // loop_pre_header
      _
    $region3: #{tpu_custom_call.1} parent=1 // loop_header
      %s14 = sphi 0, %s18
      %p15 = scmp.ge.s32.totalorder %s14, 4
      %s24 = sphi 0, %s26
      %s27 = sphi 0, %s24
      %s28 = sphi 0, %s27
      %s44 = sphi 0, %s28
      %s48 = sphi 0, %s48
      %s50 = sphi 0, %s48
      %s51 = sphi 0, %s50
      %s65 = sphi 0, %s51
      %s69 = sphi 0, %s69
      %s71 = sphi 0, %s69
      %s72 = sphi 0, %s71
      %s86 = sphi 0, %s72
      %s90 = sphi 0, %s90
      %s92 = sphi 0, %s90
      %s93 = sphi 0, %s92
      %s107 = sphi 0, %s93
      %s113 = sphi 0, %s115
      %s116 = sphi 0, %s113
      %s117 = sphi 0, %s116
      %s133 = sphi 0, %s117
    $region4: #{tpu_custom_call.1} parent=1 // loop_header_branch
      %17 = sbr.rel (%p15) target = $region8
    $region5: #{tpu_custom_call.1} parent=1 // loop_body
      %s19 = ssub.s32 %s14, 1
      %s20 = ssub.s32 %s14, 2
      %s21 = sadd.s32 %s14, 1
      %s22 = ssub.s32 %s14, %s21
      %p23 = scmp.eq.s32.totalorder %s22, 0
      %s25 = sadd.s32 %s24, 1
      %s26 = scalar_select %p23, %s24, %s25
      %p29 = pneg %p23
      %p30 = scmp.eq.s32.totalorder %s14, 1
      %p31 = por %p29, %p30
      %p32 = scmp.ne.s32.totalorder %s24, %s27
      %p33 = scmp.eq.s32.totalorder %s14, 0
      %p34 = por %p32, %p33
      %p35 = scmp.ne.s32.totalorder %s24, %s27
      %p36 = scmp.eq.s32.totalorder %s19, 1
      %p37 = por %p35, %p36
      %p38 = scmp.ne.s32.totalorder %s27, %s28
      %p39 = scmp.eq.s32.totalorder %s19, 0
      %p40 = por %p38, %p39
      %p41 = scmp.ne.s32.totalorder %s27, %s28
      %p42 = scmp.eq.s32.totalorder %s20, 1
      %p43 = por %p41, %p42
      %p45 = scmp.ne.s32.totalorder %s28, %s44
      %p46 = scmp.eq.s32.totalorder %s20, 0
      %p47 = por %p45, %p46
      %s49 = sadd.s32 %s48, 1
      %p52 = scmp.eq.s32.totalorder %s14, 1
      %p53 = scmp.ne.s32.totalorder %s48, %s50
      %p54 = scmp.eq.s32.totalorder %s14, 0
      %p55 = por %p53, %p54
      %p56 = scmp.ne.s32.totalorder %s48, %s50
      %p57 = scmp.eq.s32.totalorder %s19, 1
      %p58 = por %p56, %p57
      %p59 = scmp.ne.s32.totalorder %s50, %s51
      %p60 = scmp.eq.s32.totalorder %s19, 0
      %p61 = por %p59, %p60
      %p62 = scmp.ne.s32.totalorder %s50, %s51
      %p63 = scmp.eq.s32.totalorder %s20, 1
      %p64 = por %p62, %p63
      %p66 = scmp.ne.s32.totalorder %s51, %s65
      %p67 = scmp.eq.s32.totalorder %s20, 0
      %p68 = por %p66, %p67
      %s70 = sadd.s32 %s69, 1
      %p73 = scmp.eq.s32.totalorder %s14, 1
      %p74 = scmp.ne.s32.totalorder %s69, %s71
      %p75 = scmp.eq.s32.totalorder %s14, 0
      %p76 = por %p74, %p75
      %p77 = scmp.ne.s32.totalorder %s69, %s71
      %p78 = scmp.eq.s32.totalorder %s19, 1
      %p79 = por %p77, %p78
      %p80 = scmp.ne.s32.totalorder %s71, %s72
      %p81 = scmp.eq.s32.totalorder %s19, 0
      %p82 = por %p80, %p81
      %p83 = scmp.ne.s32.totalorder %s71, %s72
      %p84 = scmp.eq.s32.totalorder %s20, 1
      %p85 = por %p83, %p84
      %p87 = scmp.ne.s32.totalorder %s72, %s86
      %p88 = scmp.eq.s32.totalorder %s20, 0
      %p89 = por %p87, %p88
      %s91 = sadd.s32 %s90, 1
      %p94 = scmp.eq.s32.totalorder %s14, 1
      %p95 = scmp.ne.s32.totalorder %s90, %s92
      %p96 = scmp.eq.s32.totalorder %s14, 0
      %p97 = por %p95, %p96
      %p98 = scmp.ne.s32.totalorder %s90, %s92
      %p99 = scmp.eq.s32.totalorder %s19, 1
      %p100 = por %p98, %p99
      %p101 = scmp.ne.s32.totalorder %s92, %s93
      %p102 = scmp.eq.s32.totalorder %s19, 0
      %p103 = por %p101, %p102
      %p104 = scmp.ne.s32.totalorder %s92, %s93
      %p105 = scmp.eq.s32.totalorder %s20, 1
      %p106 = por %p104, %p105
      %p108 = scmp.ne.s32.totalorder %s93, %s107
      %p109 = scmp.eq.s32.totalorder %s20, 0
      %p110 = por %p108, %p109
      %s111 = ssub.s32 %s14, %s21
      %p112 = scmp.eq.s32.totalorder %s111, 0
      %s114 = sadd.s32 %s113, 1
      %s115 = scalar_select %p112, %s113, %s114
      %p118 = pneg %p112
      %p119 = scmp.eq.s32.totalorder %s14, 1
      %p120 = por %p118, %p119
      %p121 = scmp.ne.s32.totalorder %s113, %s116
      %p122 = scmp.eq.s32.totalorder %s14, 0
      %p123 = por %p121, %p122
      %p124 = scmp.ne.s32.totalorder %s113, %s116
      %p125 = scmp.eq.s32.totalorder %s19, 1
      %p126 = por %p124, %p125
      %p127 = scmp.ne.s32.totalorder %s116, %s117
      %p128 = scmp.eq.s32.totalorder %s19, 0
      %p129 = por %p127, %p128
      %p130 = scmp.ne.s32.totalorder %s116, %s117
      %p131 = scmp.eq.s32.totalorder %s20, 1
      %p132 = por %p130, %p131
      %p134 = scmp.ne.s32.totalorder %s117, %s133
      %p135 = scmp.eq.s32.totalorder %s20, 0
      %p136 = por %p134, %p135
      %p137 = scmp.le.s32.totalorder 1, %s14
      %p138 = scmp.lt.s32.totalorder %s14, 3
      %p139 = pnand %p137, %p138
      %p140 = pneg %p139
      // Predicated region
      $region9: #{tpu_custom_call.1} parent=5 // pred_check
        _
      $region10: #{tpu_custom_call.1} parent=5 // pred_check_branch
        %142 = sbr.rel (%p139) target = $region12
      $region11: #{tpu_custom_call.1} parent=5 // pred_region
        %s143 = ssub.s32 %s14, 1
        // Predicated region
        $region13: #{tpu_custom_call.1} parent=11 // pred_check
          %p144 = pneg %p61
        $region14: #{tpu_custom_call.1} parent=11 // pred_check_branch
          %146 = sbr.rel (%p144) target = $region16
        $region15: #{tpu_custom_call.1} parent=11 // pred_region
          _
        $region16: #{tpu_custom_call.1} parent=11 // pred_fallthru
          _
        // Predicated region
        $region17: #{tpu_custom_call.1} parent=11 // pred_check
          %p147 = pneg %p82
        $region18: #{tpu_custom_call.1} parent=11 // pred_check_branch
          %149 = sbr.rel (%p147) target = $region20
        $region19: #{tpu_custom_call.1} parent=11 // pred_region
          %s151 = ssub.s32 5120, 5120
          %152 = vsyncadd [#allocation3], %s151
          %s153 = sshll.u32 [#allocation2], 4
          %s154 = int_to_ptr.vmem [resolvable:$true] %s153
          %159 = dma.hbm_to_vmem [thread:$0]  %s2, 5120, %s154, [#allocation3], 64, 64, 4
        $region20: #{tpu_custom_call.1} parent=11 // pred_fallthru
          _
        // Predicated region
        $region21: #{tpu_custom_call.1} parent=11 // pred_check
          %p160 = pneg %p103
        $region22: #{tpu_custom_call.1} parent=11 // pred_check_branch
          %162 = sbr.rel (%p160) target = $region24
        $region23: #{tpu_custom_call.1} parent=11 // pred_region
          _
        $region24: #{tpu_custom_call.1} parent=11 // pred_fallthru
          _
      $region12: #{tpu_custom_call.1} parent=5 // pred_fallthru
        _
      %p163 = scmp.lt.s32.totalorder %s14, 2
      // Predicated region
      $region25: #{tpu_custom_call.1} parent=5 // pred_check
        %p164 = pneg %p163
      $region26: #{tpu_custom_call.1} parent=5 // pred_check_branch
        %166 = sbr.rel (%p164) target = $region28
      $region27: #{tpu_custom_call.1} parent=5 // pred_region
        // Predicated region
        $region29: #{tpu_custom_call.1} parent=27 // pred_check
          %p167 = pneg %p34
        $region30: #{tpu_custom_call.1} parent=27 // pred_check_branch
          %169 = sbr.rel (%p167) target = $region32
        $region31: #{tpu_custom_call.1} parent=27 // pred_region
          %s170 = smul.u32 32, %s14
          %p171 = scmp.lt.s32.totalorder %s170, 63
          %s172 = scalar_select %p171, %s170, 63
          %s173 = smul.addr %s172, 4
          %s174 = scalar_lea.vmem %s0, %s173
          %s175 = smul.u32 32, %s14
        $region32: #{tpu_custom_call.1} parent=27 // pred_fallthru
          _
      $region28: #{tpu_custom_call.1} parent=5 // pred_fallthru
        _
      %p176 = scmp.le.s32.totalorder 1, %s14
      %p177 = scmp.lt.s32.totalorder %s14, 3
      %p178 = pnand %p176, %p177
      %p179 = pneg %p178
      // Predicated region
      $region33: #{tpu_custom_call.1} parent=5 // pred_check
        _
      $region34: #{tpu_custom_call.1} parent=5 // pred_check_branch
        %181 = sbr.rel (%p178) target = $region36
      $region35: #{tpu_custom_call.1} parent=5 // pred_region
        %s182 = ssub.s32 %s14, 1
        // Predicated region
        $region37: #{tpu_custom_call.1} parent=35 // pred_check
          %p183 = pneg %p82
        $region38: #{tpu_custom_call.1} parent=35 // pred_check_branch
          %185 = sbr.rel (%p183) target = $region40
        $region39: #{tpu_custom_call.1} parent=35 // pred_region
          %186 = dma.done [#allocation3], 5120
        $region40: #{tpu_custom_call.1} parent=35 // pred_fallthru
          _
        %s187 = smul.u32 32, %s19
        %p188 = scmp.lt.s32.totalorder %s187, 63
        %s189 = scalar_select %p188, %s187, 63
        %s190 = smul.addr %s189, 4
        %s191 = scalar_lea.vmem %s0, %s190
        %p192 = pneg %p40
        %p193 = pneg %p37
        %p194 = pneg %p61
        %p195 = pneg %p58
        %p196 = pneg %p82
        %p197 = pneg %p79
        %p198 = pneg %p103
        %p199 = pneg %p100
        %p200 = pneg %p129
        %p201 = pneg %p126
        %s202 = sand.u32 %s116, 1
        %s203 = scalar_lea.sflag [#allocation4], %s202
        %s204 = sand.u32 %s116, 1
        %s205 = smul.addr %s204, 256
        %s206 = scalar_lea.vmem [#allocation5], %s205
        %s207 = smul.u32 32, %s19
        %p208 = scmp.lt.s32.totalorder %s207, 63
        %s209 = scalar_select %p208, %s207, 63
        %s210 = smul.addr %s209, 4
        %s211 = scalar_lea.vmem %s0, %s210
        %s212 = smul.u32 32, %s19
        %s213 = smul.u32 32, %s19
        %v215 = vld [vmem:[%s211] sm:$0xf]
        %v216 = vld [vmem:[%s211 + $0x4] sm:$0xf]
        %v217 = vld [vmem:[%s211 + $0x8] sm:$0xf]
        %v218 = vld [vmem:[%s211 + $0xc] sm:$0xf]
        %v219 = vld [vmem:[%s211 + $0x10] sm:$0xf]
        %v220 = vld [vmem:[%s211 + $0x14] sm:$0xf]
        %v221 = vld [vmem:[%s211 + $0x18] sm:$0xf]
        %v222 = vld [vmem:[%s211 + $0x1c] sm:$0xf]
        %v223 = vld [vmem:[%s211 + $0x20] sm:$0xf]
        %v224 = vld [vmem:[%s211 + $0x24] sm:$0xf]
        %v225 = vld [vmem:[%s211 + $0x28] sm:$0xf]
        %v226 = vld [vmem:[%s211 + $0x2c] sm:$0xf]
        %v227 = vld [vmem:[%s211 + $0x30] sm:$0xf]
        %v228 = vld [vmem:[%s211 + $0x34] sm:$0xf]
        %v229 = vld [vmem:[%s211 + $0x38] sm:$0xf]
        %v230 = vld [vmem:[%s211 + $0x3c] sm:$0xf]
        %v231 = vld [vmem:[%s211 + $0x40] sm:$0xf]
        %v232 = vld [vmem:[%s211 + $0x44] sm:$0xf]
        %v233 = vld [vmem:[%s211 + $0x48] sm:$0xf]
        %v234 = vld [vmem:[%s211 + $0x4c] sm:$0xf]
        %v235 = vld [vmem:[%s211 + $0x50] sm:$0xf]
        %v236 = vld [vmem:[%s211 + $0x54] sm:$0xf]
        %v237 = vld [vmem:[%s211 + $0x58] sm:$0xf]
        %v238 = vld [vmem:[%s211 + $0x5c] sm:$0xf]
        %v239 = vld [vmem:[%s211 + $0x60] sm:$0xf]
        %v240 = vld [vmem:[%s211 + $0x64] sm:$0xf]
        %v241 = vld [vmem:[%s211 + $0x68] sm:$0xf]
        %v242 = vld [vmem:[%s211 + $0x6c] sm:$0xf]
        %v243 = vld [vmem:[%s211 + $0x70] sm:$0xf]
        %v244 = vld [vmem:[%s211 + $0x74] sm:$0xf]
        %v245 = vld [vmem:[%s211 + $0x78] sm:$0xf]
        %v246 = vld [vmem:[%s211 + $0x7c] sm:$0xf]
        %v247 = vld [vmem:[%s1] sm:$0xf]
        %v248 = vld [vmem:[%s1 + $0x4] sm:$0xf]
        %v249 = vld [vmem:[%s3] sm:$0x1]
        %v251 = vlaneseq
        %v252 = vshrl.u32 %v251, 7
        %v253 = vsub.s32 0, %v252
        %v254 = vrot.slane %v249, %v253
        %v288 = vunpack.c.l.b16 %v215
        %v289 = vunpack.c.l.b16 %v216
        %v290 = vunpack.c.l.b16 %v217
        %v291 = vunpack.c.l.b16 %v218
        %v292 = vunpack.c.l.b16 %v219
        %v293 = vunpack.c.l.b16 %v220
        %v294 = vunpack.c.l.b16 %v221
        %v295 = vunpack.c.l.b16 %v222
        %v296 = vunpack.c.l.b16 %v223
        %v297 = vunpack.c.l.b16 %v224
        %v298 = vunpack.c.l.b16 %v225
        %v299 = vunpack.c.l.b16 %v226
        %v300 = vunpack.c.l.b16 %v227
        %v301 = vunpack.c.l.b16 %v228
        %v302 = vunpack.c.l.b16 %v229
        %v303 = vunpack.c.l.b16 %v230
        %v304 = vunpack.c.l.b16 %v231
        %v305 = vunpack.c.l.b16 %v232
        %v306 = vunpack.c.l.b16 %v233
        %v307 = vunpack.c.l.b16 %v234
        %v308 = vunpack.c.l.b16 %v235
        %v309 = vunpack.c.l.b16 %v236
        %v310 = vunpack.c.l.b16 %v237
        %v311 = vunpack.c.l.b16 %v238
        %v312 = vunpack.c.l.b16 %v239
        %v313 = vunpack.c.l.b16 %v240
        %v314 = vunpack.c.l.b16 %v241
        %v315 = vunpack.c.l.b16 %v242
        %v316 = vunpack.c.l.b16 %v243
        %v317 = vunpack.c.l.b16 %v244
        %v318 = vunpack.c.l.b16 %v245
        %v319 = vunpack.c.l.b16 %v246
        %v320 = vpack.c.b16 %v289, %v288
        %v321 = vpack.c.b16 %v291, %v290
        %v322 = vpack.c.b16 %v293, %v292
        %v323 = vpack.c.b16 %v295, %v294
        %v324 = vpack.c.b16 %v297, %v296
        %v325 = vpack.c.b16 %v299, %v298
        %v326 = vpack.c.b16 %v301, %v300
        %v327 = vpack.c.b16 %v303, %v302
        %v328 = vpack.c.b16 %v305, %v304
        %v329 = vpack.c.b16 %v307, %v306
        %v330 = vpack.c.b16 %v309, %v308
        %v331 = vpack.c.b16 %v311, %v310
        %v332 = vpack.c.b16 %v313, %v312
        %v333 = vpack.c.b16 %v315, %v314
        %v334 = vpack.c.b16 %v317, %v316
        %v335 = vpack.c.b16 %v319, %v318
        %v338 = vunpack.c.l.b16 %v247
        %v339 = vunpack.c.l.b16 %v248
        %v340 = vpack.c.b16 %v339, %v338
        %vm342 = vcmask 130048
        %v344 = vsel %vm342, %v320, 0
        %v347 = vsel %vm342, %v321, 0
        %v350 = vsel %vm342, %v322, 0
        %v353 = vsel %vm342, %v323, 0
        %v356 = vsel %vm342, %v324, 0
        %v359 = vsel %vm342, %v325, 0
        %v362 = vsel %vm342, %v326, 0
        %v365 = vsel %vm342, %v327, 0
        %v368 = vsel %vm342, %v328, 0
        %v371 = vsel %vm342, %v329, 0
        %v374 = vsel %vm342, %v330, 0
        %v377 = vsel %vm342, %v331, 0
        %v380 = vsel %vm342, %v332, 0
        %v383 = vsel %vm342, %v333, 0
        %v386 = vsel %vm342, %v334, 0
        %v389 = vsel %vm342, %v335, 0
        %391 = vmatprep.subr.bf16.mxu0 0
        %392 = vmatpush1.bf16.msra.mxu0 0
        %393 = vmatprep.subr.bf16.mxu0 0
        %394 = vmatpush1.bf16.msra.mxu0 0
        %395 = vmatprep.subr.bf16.mxu0 0
        %396 = vmatpush1.bf16.msra.mxu0 0
        %397 = vmatprep.subr.bf16.mxu0 0
        %398 = vmatpush1.bf16.msra.mxu0 0
        %399 = vmatprep.subr.bf16.mxu0 0
        %400 = vmatpush1.bf16.msra.mxu0 0
        %401 = vmatprep.subr.bf16.mxu0 0
        %402 = vmatpush1.bf16.msra.mxu0 0
        %403 = vmatprep.subr.bf16.mxu0 0
        %404 = vmatpush1.bf16.msra.mxu0 0
        %405 = vmatprep.subr.bf16.mxu0 0
        %406 = vmatpush1.bf16.msra.mxu0 %v340
        %407 = vmatprep.subr.bf16.mxu0 0
        %408 = vmatpush2.bf16.msra.mxu0 0
        %409 = vmatprep.subr.bf16.mxu0 0
        %410 = vmatpush2.bf16.msra.mxu0 0
        %411 = vmatprep.subr.bf16.mxu0 0
        %412 = vmatpush2.bf16.msra.mxu0 0
        %413 = vmatprep.subr.bf16.mxu0 0
        %414 = vmatpush2.bf16.msra.mxu0 0
        %415 = vmatprep.subr.bf16.mxu0 0
        %416 = vmatpush2.bf16.msra.mxu0 0
        %417 = vmatprep.subr.bf16.mxu0 0
        %418 = vmatpush2.bf16.msra.mxu0 0
        %419 = vmatprep.subr.bf16.mxu0 0
        %420 = vmatpush2.bf16.msra.mxu0 0
        %421 = vmatprep.subr.bf16.mxu0 0
        %422 = vmatpush2.bf16.msra.mxu0 0
        %423 = vmatprep.mubr.bf16.mxu0 0
        %424 = vmatmul.mubr.bf16.gmra.mxu0 %v344
        %v425 = vpop.f32.mrf.mxu0
        %v426 = vadd.f32 %v254, %v425
        %v427 = vpop.f32.mrf.mxu0
        %v428 = vpop.f32.mrf.mxu0
        %v429 = vadd.f32 %v254, %v428
        %v430 = vpop.f32.mrf.mxu0
        %431 = vmatprep.mubr.bf16.mxu0 0
        %432 = vmatmul.mubr.bf16.gmra.mxu0 %v347
        %v433 = vpop.f32.mrf.mxu0
        %v434 = vadd.f32 %v254, %v433
        %v435 = vpop.f32.mrf.mxu0
        %v436 = vpop.f32.mrf.mxu0
        %v437 = vadd.f32 %v254, %v436
        %v438 = vpop.f32.mrf.mxu0
        %439 = vmatprep.mubr.bf16.mxu0 0
        %440 = vmatmul.mubr.bf16.gmra.mxu0 %v350
        %v441 = vpop.f32.mrf.mxu0
        %v442 = vadd.f32 %v254, %v441
        %v443 = vpop.f32.mrf.mxu0
        %v444 = vpop.f32.mrf.mxu0
        %v445 = vadd.f32 %v254, %v444
        %v446 = vpop.f32.mrf.mxu0
        %447 = vmatprep.mubr.bf16.mxu0 0
        %448 = vmatmul.mubr.bf16.gmra.mxu0 %v353
        %v449 = vpop.f32.mrf.mxu0
        %v450 = vadd.f32 %v254, %v449
        %v451 = vpop.f32.mrf.mxu0
        %v452 = vpop.f32.mrf.mxu0
        %v453 = vadd.f32 %v254, %v452
        %v454 = vpop.f32.mrf.mxu0
        %455 = vmatprep.mubr.bf16.mxu0 0
        %456 = vmatmul.mubr.bf16.gmra.mxu0 %v356
        %v457 = vpop.f32.mrf.mxu0
        %v458 = vadd.f32 %v254, %v457
        %v459 = vpop.f32.mrf.mxu0
        %v460 = vpop.f32.mrf.mxu0
        %v461 = vadd.f32 %v254, %v460
        %v462 = vpop.f32.mrf.mxu0
        %463 = vmatprep.mubr.bf16.mxu0 0
        %464 = vmatmul.mubr.bf16.gmra.mxu0 %v359
        %v465 = vpop.f32.mrf.mxu0
        %v466 = vadd.f32 %v254, %v465
        %v467 = vpop.f32.mrf.mxu0
        %v468 = vpop.f32.mrf.mxu0
        %v469 = vadd.f32 %v254, %v468
        %v470 = vpop.f32.mrf.mxu0
        %471 = vmatprep.mubr.bf16.mxu0 0
        %472 = vmatmul.mubr.bf16.gmra.mxu0 %v362
        %v473 = vpop.f32.mrf.mxu0
        %v474 = vadd.f32 %v254, %v473
        %v475 = vpop.f32.mrf.mxu0
        %v476 = vpop.f32.mrf.mxu0
        %v477 = vadd.f32 %v254, %v476
        %v478 = vpop.f32.mrf.mxu0
        %479 = vmatprep.mubr.bf16.mxu0 0
        %480 = vmatmul.mubr.bf16.gmra.mxu0 %v365
        %v481 = vpop.f32.mrf.mxu0
        %v482 = vadd.f32 %v254, %v481
        %v483 = vpop.f32.mrf.mxu0
        %v484 = vpop.f32.mrf.mxu0
        %v485 = vadd.f32 %v254, %v484
        %v486 = vpop.f32.mrf.mxu0
        %487 = vmatprep.mubr.bf16.mxu0 0
        %488 = vmatmul.mubr.bf16.gmra.mxu0 %v368
        %v489 = vpop.f32.mrf.mxu0
        %v490 = vadd.f32 %v254, %v489
        %v491 = vpop.f32.mrf.mxu0
        %v492 = vpop.f32.mrf.mxu0
        %v493 = vadd.f32 %v254, %v492
        %v494 = vpop.f32.mrf.mxu0
        %495 = vmatprep.mubr.bf16.mxu0 0
        %496 = vmatmul.mubr.bf16.gmra.mxu0 %v371
        %v497 = vpop.f32.mrf.mxu0
        %v498 = vadd.f32 %v254, %v497
        %v499 = vpop.f32.mrf.mxu0
        %v500 = vpop.f32.mrf.mxu0
        %v501 = vadd.f32 %v254, %v500
        %v502 = vpop.f32.mrf.mxu0
        %503 = vmatprep.mubr.bf16.mxu0 0
        %504 = vmatmul.mubr.bf16.gmra.mxu0 %v374
        %v505 = vpop.f32.mrf.mxu0
        %v506 = vadd.f32 %v254, %v505
        %v507 = vpop.f32.mrf.mxu0
        %v508 = vpop.f32.mrf.mxu0
        %v509 = vadd.f32 %v254, %v508
        %v510 = vpop.f32.mrf.mxu0
        %511 = vmatprep.mubr.bf16.mxu0 0
        %512 = vmatmul.mubr.bf16.gmra.mxu0 %v377
        %v513 = vpop.f32.mrf.mxu0
        %v514 = vadd.f32 %v254, %v513
        %v515 = vpop.f32.mrf.mxu0
        %v516 = vpop.f32.mrf.mxu0
        %v517 = vadd.f32 %v254, %v516
        %v518 = vpop.f32.mrf.mxu0
        %519 = vmatprep.mubr.bf16.mxu0 0
        %520 = vmatmul.mubr.bf16.gmra.mxu0 %v380
        %v521 = vpop.f32.mrf.mxu0
        %v522 = vadd.f32 %v254, %v521
        %v523 = vpop.f32.mrf.mxu0
        %v524 = vpop.f32.mrf.mxu0
        %v525 = vadd.f32 %v254, %v524
        %v526 = vpop.f32.mrf.mxu0
        %527 = vmatprep.mubr.bf16.mxu0 0
        %528 = vmatmul.mubr.bf16.gmra.mxu0 %v383
        %v529 = vpop.f32.mrf.mxu0
        %v530 = vadd.f32 %v254, %v529
        %v531 = vpop.f32.mrf.mxu0
        %v532 = vpop.f32.mrf.mxu0
        %v533 = vadd.f32 %v254, %v532
        %v534 = vpop.f32.mrf.mxu0
        %535 = vmatprep.mubr.bf16.mxu0 0
        %536 = vmatmul.mubr.bf16.gmra.mxu0 %v386
        %v537 = vpop.f32.mrf.mxu0
        %v538 = vadd.f32 %v254, %v537
        %v539 = vpop.f32.mrf.mxu0
        %v540 = vpop.f32.mrf.mxu0
        %v541 = vadd.f32 %v254, %v540
        %v542 = vpop.f32.mrf.mxu0
        %543 = vmatprep.mubr.bf16.mxu0 0
        %544 = vmatmul.mubr.bf16.gmra.mxu0 %v389
        %v545 = vpop.f32.mrf.mxu0
        %v546 = vadd.f32 %v254, %v545
        %v547 = vpop.f32.mrf.mxu0
        %v548 = vpop.f32.mrf.mxu0
        %v549 = vadd.f32 %v254, %v548
        %v550 = vpop.f32.mrf.mxu0
        %551 = vdwg.mxu0
        %v552 = vtanh.pop %v426
        %v553 = vtanh.pop %v429
        %v554 = vtanh.pop %v434
        %v555 = vtanh.pop %v437
        %v556 = vtanh.pop %v442
        %v557 = vtanh.pop %v445
        %v558 = vtanh.pop %v450
        %v559 = vtanh.pop %v453
        %v560 = vtanh.pop %v458
        %v561 = vtanh.pop %v461
        %v562 = vtanh.pop %v466
        %v563 = vtanh.pop %v469
        %v564 = vtanh.pop %v474
        %v565 = vtanh.pop %v477
        %v566 = vtanh.pop %v482
        %v567 = vtanh.pop %v485
        %v568 = vtanh.pop %v490
        %v569 = vtanh.pop %v493
        %v570 = vtanh.pop %v498
        %v571 = vtanh.pop %v501
        %v572 = vtanh.pop %v506
        %v573 = vtanh.pop %v509
        %v574 = vtanh.pop %v514
        %v575 = vtanh.pop %v517
        %v576 = vtanh.pop %v522
        %v577 = vtanh.pop %v525
        %v578 = vtanh.pop %v530
        %v579 = vtanh.pop %v533
        %v580 = vtanh.pop %v538
        %v581 = vtanh.pop %v541
        %v582 = vtanh.pop %v546
        %v583 = vtanh.pop %v549
        %v584 = vpack.c.bf16 %v553, %v552
        %v585 = vpack.c.bf16 %v555, %v554
        %v586 = vpack.c.bf16 %v557, %v556
        %v587 = vpack.c.bf16 %v559, %v558
        %v588 = vpack.c.bf16 %v561, %v560
        %v589 = vpack.c.bf16 %v563, %v562
        %v590 = vpack.c.bf16 %v565, %v564
        %v591 = vpack.c.bf16 %v567, %v566
        %v592 = vpack.c.bf16 %v569, %v568
        %v593 = vpack.c.bf16 %v571, %v570
        %v594 = vpack.c.bf16 %v573, %v572
        %v595 = vpack.c.bf16 %v575, %v574
        %v596 = vpack.c.bf16 %v577, %v576
        %v597 = vpack.c.bf16 %v579, %v578
        %v598 = vpack.c.bf16 %v581, %v580
        %v599 = vpack.c.bf16 %v583, %v582
        %v600 = vld [vmem:[#allocation2] sm:$0xf]
        %v601 = vld [vmem:[#allocation2 + $0x4] sm:$0xf]
        %v602 = vld [vmem:[#allocation2 + $0x8] sm:$0xf]
        %v603 = vld [vmem:[#allocation2 + $0xc] sm:$0xf]
        %v604 = vld [vmem:[#allocation2 + $0x10] sm:$0xf]
        %v605 = vld [vmem:[#allocation2 + $0x14] sm:$0xf]
        %v606 = vld [vmem:[#allocation2 + $0x18] sm:$0xf]
        %v607 = vld [vmem:[#allocation2 + $0x1c] sm:$0xf]
        %v608 = vld [vmem:[#allocation2 + $0x20] sm:$0xf]
        %v609 = vld [vmem:[#allocation2 + $0x24] sm:$0xf]
        %v610 = vld [vmem:[#allocation2 + $0x28] sm:$0xf]
        %v611 = vld [vmem:[#allocation2 + $0x2c] sm:$0xf]
        %v612 = vld [vmem:[#allocation2 + $0x30] sm:$0xf]
        %v613 = vld [vmem:[#allocation2 + $0x34] sm:$0xf]
        %v614 = vld [vmem:[#allocation2 + $0x38] sm:$0xf]
        %v615 = vld [vmem:[#allocation2 + $0x3c] sm:$0xf]
        %s616 = scalar_lea.vmem %s3, 1
        %v617 = vld [vmem:[%s616] sm:$0x1]
        %v619 = vlaneseq
        %v620 = vshrl.u32 %v619, 7
        %v621 = vsub.s32 0, %v620
        %v622 = vrot.slane %v617, %v621
        %v640 = vunpack.c.l.b16 %v600
        %v641 = vunpack.c.l.b16 %v601
        %v642 = vunpack.c.l.b16 %v602
        %v643 = vunpack.c.l.b16 %v603
        %v644 = vunpack.c.l.b16 %v604
        %v645 = vunpack.c.l.b16 %v605
        %v646 = vunpack.c.l.b16 %v606
        %v647 = vunpack.c.l.b16 %v607
        %v648 = vunpack.c.l.b16 %v608
        %v649 = vunpack.c.l.b16 %v609
        %v650 = vunpack.c.l.b16 %v610
        %v651 = vunpack.c.l.b16 %v611
        %v652 = vunpack.c.l.b16 %v612
        %v653 = vunpack.c.l.b16 %v613
        %v654 = vunpack.c.l.b16 %v614
        %v655 = vunpack.c.l.b16 %v615
        %v656 = vpack.c.b16 %v641, %v640
        %v657 = vpack.c.b16 %v643, %v642
        %v658 = vpack.c.b16 %v645, %v644
        %v659 = vpack.c.b16 %v647, %v646
        %v660 = vpack.c.b16 %v649, %v648
        %v661 = vpack.c.b16 %v651, %v650
        %v662 = vpack.c.b16 %v653, %v652
        %v663 = vpack.c.b16 %v655, %v654
        %672 = vmatprep.subr.bf16.mxu0 0
        %673 = vmatpush1.bf16.msra.mxu0 %v663
        %674 = vmatprep.subr.bf16.mxu0 0
        %675 = vmatpush1.bf16.msra.mxu0 %v662
        %676 = vmatprep.subr.bf16.mxu0 0
        %677 = vmatpush1.bf16.msra.mxu0 %v661
        %678 = vmatprep.subr.bf16.mxu0 0
        %679 = vmatpush1.bf16.msra.mxu0 %v660
        %680 = vmatprep.subr.bf16.mxu0 0
        %681 = vmatpush1.bf16.msra.mxu0 %v659
        %682 = vmatprep.subr.bf16.mxu0 0
        %683 = vmatpush1.bf16.msra.mxu0 %v658
        %684 = vmatprep.subr.bf16.mxu0 0
        %685 = vmatpush1.bf16.msra.mxu0 %v657
        %686 = vmatprep.subr.bf16.mxu0 0
        %687 = vmatpush1.bf16.msra.mxu0 %v656
        %688 = vmatprep.subr.bf16.mxu0 0
        %689 = vmatpush2.bf16.msra.mxu0 0
        %690 = vmatprep.subr.bf16.mxu0 0
        %691 = vmatpush2.bf16.msra.mxu0 0
        %692 = vmatprep.subr.bf16.mxu0 0
        %693 = vmatpush2.bf16.msra.mxu0 0
        %694 = vmatprep.subr.bf16.mxu0 0
        %695 = vmatpush2.bf16.msra.mxu0 0
        %696 = vmatprep.subr.bf16.mxu0 0
        %697 = vmatpush2.bf16.msra.mxu0 0
        %698 = vmatprep.subr.bf16.mxu0 0
        %699 = vmatpush2.bf16.msra.mxu0 0
        %700 = vmatprep.subr.bf16.mxu0 0
        %701 = vmatpush2.bf16.msra.mxu0 0
        %702 = vmatprep.subr.bf16.mxu0 0
        %703 = vmatpush2.bf16.msra.mxu0 0
        %704 = vmatprep.mubr.bf16.mxu0 0
        %705 = vmatmul.mubr.bf16.gmra.mxu0 %v584
        %v706 = vpop.f32.mrf.mxu0
        %v707 = vadd.f32 %v622, %v706
        %v708 = vpop.f32.mrf.mxu0
        %v709 = vpop.f32.mrf.mxu0
        %v710 = vadd.f32 %v622, %v709
        %v711 = vpop.f32.mrf.mxu0
        %712 = vmatprep.mubr.bf16.mxu0 0
        %713 = vmatmul.mubr.bf16.gmra.mxu0 %v585
        %v714 = vpop.f32.mrf.mxu0
        %v715 = vadd.f32 %v622, %v714
        %v716 = vpop.f32.mrf.mxu0
        %v717 = vpop.f32.mrf.mxu0
        %v718 = vadd.f32 %v622, %v717
        %v719 = vpop.f32.mrf.mxu0
        %720 = vmatprep.mubr.bf16.mxu0 0
        %721 = vmatmul.mubr.bf16.gmra.mxu0 %v586
        %v722 = vpop.f32.mrf.mxu0
        %v723 = vadd.f32 %v622, %v722
        %v724 = vpop.f32.mrf.mxu0
        %v725 = vpop.f32.mrf.mxu0
        %v726 = vadd.f32 %v622, %v725
        %v727 = vpop.f32.mrf.mxu0
        %728 = vmatprep.mubr.bf16.mxu0 0
        %729 = vmatmul.mubr.bf16.gmra.mxu0 %v587
        %v730 = vpop.f32.mrf.mxu0
        %v731 = vadd.f32 %v622, %v730
        %v732 = vpop.f32.mrf.mxu0
        %v733 = vpop.f32.mrf.mxu0
        %v734 = vadd.f32 %v622, %v733
        %v735 = vpop.f32.mrf.mxu0
        %736 = vmatprep.mubr.bf16.mxu0 0
        %737 = vmatmul.mubr.bf16.gmra.mxu0 %v588
        %v738 = vpop.f32.mrf.mxu0
        %v739 = vadd.f32 %v622, %v738
        %v740 = vpop.f32.mrf.mxu0
        %v741 = vpop.f32.mrf.mxu0
        %v742 = vadd.f32 %v622, %v741
        %v743 = vpop.f32.mrf.mxu0
        %744 = vmatprep.mubr.bf16.mxu0 0
        %745 = vmatmul.mubr.bf16.gmra.mxu0 %v589
        %v746 = vpop.f32.mrf.mxu0
        %v747 = vadd.f32 %v622, %v746
        %v748 = vpop.f32.mrf.mxu0
        %v749 = vpop.f32.mrf.mxu0
        %v750 = vadd.f32 %v622, %v749
        %v751 = vpop.f32.mrf.mxu0
        %752 = vmatprep.mubr.bf16.mxu0 0
        %753 = vmatmul.mubr.bf16.gmra.mxu0 %v590
        %v754 = vpop.f32.mrf.mxu0
        %v755 = vadd.f32 %v622, %v754
        %v756 = vpop.f32.mrf.mxu0
        %v757 = vpop.f32.mrf.mxu0
        %v758 = vadd.f32 %v622, %v757
        %v759 = vpop.f32.mrf.mxu0
        %760 = vmatprep.mubr.bf16.mxu0 0
        %761 = vmatmul.mubr.bf16.gmra.mxu0 %v591
        %v762 = vpop.f32.mrf.mxu0
        %v763 = vadd.f32 %v622, %v762
        %v764 = vpop.f32.mrf.mxu0
        %v765 = vpop.f32.mrf.mxu0
        %v766 = vadd.f32 %v622, %v765
        %v767 = vpop.f32.mrf.mxu0
        %768 = vmatprep.mubr.bf16.mxu0 0
        %769 = vmatmul.mubr.bf16.gmra.mxu0 %v592
        %v770 = vpop.f32.mrf.mxu0
        %v771 = vadd.f32 %v622, %v770
        %v772 = vpop.f32.mrf.mxu0
        %v773 = vpop.f32.mrf.mxu0
        %v774 = vadd.f32 %v622, %v773
        %v775 = vpop.f32.mrf.mxu0
        %776 = vmatprep.mubr.bf16.mxu0 0
        %777 = vmatmul.mubr.bf16.gmra.mxu0 %v593
        %v778 = vpop.f32.mrf.mxu0
        %v779 = vadd.f32 %v622, %v778
        %v780 = vpop.f32.mrf.mxu0
        %v781 = vpop.f32.mrf.mxu0
        %v782 = vadd.f32 %v622, %v781
        %v783 = vpop.f32.mrf.mxu0
        %784 = vmatprep.mubr.bf16.mxu0 0
        %785 = vmatmul.mubr.bf16.gmra.mxu0 %v594
        %v786 = vpop.f32.mrf.mxu0
        %v787 = vadd.f32 %v622, %v786
        %v788 = vpop.f32.mrf.mxu0
        %v789 = vpop.f32.mrf.mxu0
        %v790 = vadd.f32 %v622, %v789
        %v791 = vpop.f32.mrf.mxu0
        %792 = vmatprep.mubr.bf16.mxu0 0
        %793 = vmatmul.mubr.bf16.gmra.mxu0 %v595
        %v794 = vpop.f32.mrf.mxu0
        %v795 = vadd.f32 %v622, %v794
        %v796 = vpop.f32.mrf.mxu0
        %v797 = vpop.f32.mrf.mxu0
        %v798 = vadd.f32 %v622, %v797
        %v799 = vpop.f32.mrf.mxu0
        %800 = vmatprep.mubr.bf16.mxu0 0
        %801 = vmatmul.mubr.bf16.gmra.mxu0 %v596
        %v802 = vpop.f32.mrf.mxu0
        %v803 = vadd.f32 %v622, %v802
        %v804 = vpop.f32.mrf.mxu0
        %v805 = vpop.f32.mrf.mxu0
        %v806 = vadd.f32 %v622, %v805
        %v807 = vpop.f32.mrf.mxu0
        %808 = vmatprep.mubr.bf16.mxu0 0
        %809 = vmatmul.mubr.bf16.gmra.mxu0 %v597
        %v810 = vpop.f32.mrf.mxu0
        %v811 = vadd.f32 %v622, %v810
        %v812 = vpop.f32.mrf.mxu0
        %v813 = vpop.f32.mrf.mxu0
        %v814 = vadd.f32 %v622, %v813
        %v815 = vpop.f32.mrf.mxu0
        %816 = vmatprep.mubr.bf16.mxu0 0
        %817 = vmatmul.mubr.bf16.gmra.mxu0 %v598
        %v818 = vpop.f32.mrf.mxu0
        %v819 = vadd.f32 %v622, %v818
        %v820 = vpop.f32.mrf.mxu0
        %v821 = vpop.f32.mrf.mxu0
        %v822 = vadd.f32 %v622, %v821
        %v823 = vpop.f32.mrf.mxu0
        %824 = vmatprep.mubr.bf16.mxu0 0
        %825 = vmatmul.mubr.bf16.gmra.mxu0 %v599
        %v826 = vpop.f32.mrf.mxu0
        %v827 = vadd.f32 %v622, %v826
        %v828 = vpop.f32.mrf.mxu0
        %v829 = vpop.f32.mrf.mxu0
        %v830 = vadd.f32 %v622, %v829
        %v831 = vpop.f32.mrf.mxu0
        %832 = vdwg.mxu0
        %v833 = vtanh.pop %v707
        %v834 = vtanh.pop %v710
        %v835 = vtanh.pop %v715
        %v836 = vtanh.pop %v718
        %v837 = vtanh.pop %v723
        %v838 = vtanh.pop %v726
        %v839 = vtanh.pop %v731
        %v840 = vtanh.pop %v734
        %v841 = vtanh.pop %v739
        %v842 = vtanh.pop %v742
        %v843 = vtanh.pop %v747
        %v844 = vtanh.pop %v750
        %v845 = vtanh.pop %v755
        %v846 = vtanh.pop %v758
        %v847 = vtanh.pop %v763
        %v848 = vtanh.pop %v766
        %v849 = vtanh.pop %v771
        %v850 = vtanh.pop %v774
        %v851 = vtanh.pop %v779
        %v852 = vtanh.pop %v782
        %v853 = vtanh.pop %v787
        %v854 = vtanh.pop %v790
        %v855 = vtanh.pop %v795
        %v856 = vtanh.pop %v798
        %v857 = vtanh.pop %v803
        %v858 = vtanh.pop %v806
        %v859 = vtanh.pop %v811
        %v860 = vtanh.pop %v814
        %v861 = vtanh.pop %v819
        %v862 = vtanh.pop %v822
        %v863 = vtanh.pop %v827
        %v864 = vtanh.pop %v830
        %v865 = vpack.c.bf16 %v834, %v833
        %v866 = vpack.c.bf16 %v836, %v835
        %v867 = vpack.c.bf16 %v838, %v837
        %v868 = vpack.c.bf16 %v840, %v839
        %v869 = vpack.c.bf16 %v842, %v841
        %v870 = vpack.c.bf16 %v844, %v843
        %v871 = vpack.c.bf16 %v846, %v845
        %v872 = vpack.c.bf16 %v848, %v847
        %v873 = vpack.c.bf16 %v850, %v849
        %v874 = vpack.c.bf16 %v852, %v851
        %v875 = vpack.c.bf16 %v854, %v853
        %v876 = vpack.c.bf16 %v856, %v855
        %v877 = vpack.c.bf16 %v858, %v857
        %v878 = vpack.c.bf16 %v860, %v859
        %v879 = vpack.c.bf16 %v862, %v861
        %v880 = vpack.c.bf16 %v864, %v863
        %s881 = scalar_lea.vmem [#allocation2], 64
        %v882 = vld [vmem:[%s881] sm:$0xf]
        %v883 = vld [vmem:[%s881 + $0x4] sm:$0xf]
        %v884 = vld [vmem:[%s881 + $0x8] sm:$0xf]
        %v885 = vld [vmem:[%s881 + $0xc] sm:$0xf]
        %v886 = vld [vmem:[%s881 + $0x10] sm:$0xf]
        %v887 = vld [vmem:[%s881 + $0x14] sm:$0xf]
        %v888 = vld [vmem:[%s881 + $0x18] sm:$0xf]
        %v889 = vld [vmem:[%s881 + $0x1c] sm:$0xf]
        %v890 = vld [vmem:[%s881 + $0x20] sm:$0xf]
        %v891 = vld [vmem:[%s881 + $0x24] sm:$0xf]
        %v892 = vld [vmem:[%s881 + $0x28] sm:$0xf]
        %v893 = vld [vmem:[%s881 + $0x2c] sm:$0xf]
        %v894 = vld [vmem:[%s881 + $0x30] sm:$0xf]
        %v895 = vld [vmem:[%s881 + $0x34] sm:$0xf]
        %v896 = vld [vmem:[%s881 + $0x38] sm:$0xf]
        %v897 = vld [vmem:[%s881 + $0x3c] sm:$0xf]
        %s898 = scalar_lea.vmem %s3, 2
        %v899 = vld [vmem:[%s898] sm:$0x1]
        %v901 = vlaneseq
        %v902 = vshrl.u32 %v901, 7
        %v903 = vsub.s32 0, %v902
        %v904 = vrot.slane %v899, %v903
        %v922 = vunpack.c.l.b16 %v882
        %v923 = vunpack.c.l.b16 %v883
        %v924 = vunpack.c.l.b16 %v884
        %v925 = vunpack.c.l.b16 %v885
        %v926 = vunpack.c.l.b16 %v886
        %v927 = vunpack.c.l.b16 %v887
        %v928 = vunpack.c.l.b16 %v888
        %v929 = vunpack.c.l.b16 %v889
        %v930 = vunpack.c.l.b16 %v890
        %v931 = vunpack.c.l.b16 %v891
        %v932 = vunpack.c.l.b16 %v892
        %v933 = vunpack.c.l.b16 %v893
        %v934 = vunpack.c.l.b16 %v894
        %v935 = vunpack.c.l.b16 %v895
        %v936 = vunpack.c.l.b16 %v896
        %v937 = vunpack.c.l.b16 %v897
        %v938 = vpack.c.b16 %v923, %v922
        %v939 = vpack.c.b16 %v925, %v924
        %v940 = vpack.c.b16 %v927, %v926
        %v941 = vpack.c.b16 %v929, %v928
        %v942 = vpack.c.b16 %v931, %v930
        %v943 = vpack.c.b16 %v933, %v932
        %v944 = vpack.c.b16 %v935, %v934
        %v945 = vpack.c.b16 %v937, %v936
        %954 = vmatprep.subr.bf16.mxu0 0
        %955 = vmatpush1.bf16.msra.mxu0 %v945
        %956 = vmatprep.subr.bf16.mxu0 0
        %957 = vmatpush1.bf16.msra.mxu0 %v944
        %958 = vmatprep.subr.bf16.mxu0 0
        %959 = vmatpush1.bf16.msra.mxu0 %v943
        %960 = vmatprep.subr.bf16.mxu0 0
        %961 = vmatpush1.bf16.msra.mxu0 %v942
        %962 = vmatprep.subr.bf16.mxu0 0
        %963 = vmatpush1.bf16.msra.mxu0 %v941
        %964 = vmatprep.subr.bf16.mxu0 0
        %965 = vmatpush1.bf16.msra.mxu0 %v940
        %966 = vmatprep.subr.bf16.mxu0 0
        %967 = vmatpush1.bf16.msra.mxu0 %v939
        %968 = vmatprep.subr.bf16.mxu0 0
        %969 = vmatpush1.bf16.msra.mxu0 %v938
        %970 = vmatprep.subr.bf16.mxu0 0
        %971 = vmatpush2.bf16.msra.mxu0 0
        %972 = vmatprep.subr.bf16.mxu0 0
        %973 = vmatpush2.bf16.msra.mxu0 0
        %974 = vmatprep.subr.bf16.mxu0 0
        %975 = vmatpush2.bf16.msra.mxu0 0
        %976 = vmatprep.subr.bf16.mxu0 0
        %977 = vmatpush2.bf16.msra.mxu0 0
        %978 = vmatprep.subr.bf16.mxu0 0
        %979 = vmatpush2.bf16.msra.mxu0 0
        %980 = vmatprep.subr.bf16.mxu0 0
        %981 = vmatpush2.bf16.msra.mxu0 0
        %982 = vmatprep.subr.bf16.mxu0 0
        %983 = vmatpush2.bf16.msra.mxu0 0
        %984 = vmatprep.subr.bf16.mxu0 0
        %985 = vmatpush2.bf16.msra.mxu0 0
        %986 = vmatprep.mubr.bf16.mxu0 0
        %987 = vmatmul.mubr.bf16.gmra.mxu0 %v865
        %v988 = vpop.f32.mrf.mxu0
        %v989 = vadd.f32 %v904, %v988
        %v990 = vpop.f32.mrf.mxu0
        %v991 = vpop.f32.mrf.mxu0
        %v992 = vadd.f32 %v904, %v991
        %v993 = vpop.f32.mrf.mxu0
        %994 = vmatprep.mubr.bf16.mxu0 0
        %995 = vmatmul.mubr.bf16.gmra.mxu0 %v866
        %v996 = vpop.f32.mrf.mxu0
        %v997 = vadd.f32 %v904, %v996
        %v998 = vpop.f32.mrf.mxu0
        %v999 = vpop.f32.mrf.mxu0
        %v1000 = vadd.f32 %v904, %v999
        %v1001 = vpop.f32.mrf.mxu0
        %1002 = vmatprep.mubr.bf16.mxu0 0
        %1003 = vmatmul.mubr.bf16.gmra.mxu0 %v867
        %v1004 = vpop.f32.mrf.mxu0
        %v1005 = vadd.f32 %v904, %v1004
        %v1006 = vpop.f32.mrf.mxu0
        %v1007 = vpop.f32.mrf.mxu0
        %v1008 = vadd.f32 %v904, %v1007
        %v1009 = vpop.f32.mrf.mxu0
        %1010 = vmatprep.mubr.bf16.mxu0 0
        %1011 = vmatmul.mubr.bf16.gmra.mxu0 %v868
        %v1012 = vpop.f32.mrf.mxu0
        %v1013 = vadd.f32 %v904, %v1012
        %v1014 = vpop.f32.mrf.mxu0
        %v1015 = vpop.f32.mrf.mxu0
        %v1016 = vadd.f32 %v904, %v1015
        %v1017 = vpop.f32.mrf.mxu0
        %1018 = vmatprep.mubr.bf16.mxu0 0
        %1019 = vmatmul.mubr.bf16.gmra.mxu0 %v869
        %v1020 = vpop.f32.mrf.mxu0
        %v1021 = vadd.f32 %v904, %v1020
        %v1022 = vpop.f32.mrf.mxu0
        %v1023 = vpop.f32.mrf.mxu0
        %v1024 = vadd.f32 %v904, %v1023
        %v1025 = vpop.f32.mrf.mxu0
        %1026 = vmatprep.mubr.bf16.mxu0 0
        %1027 = vmatmul.mubr.bf16.gmra.mxu0 %v870
        %v1028 = vpop.f32.mrf.mxu0
        %v1029 = vadd.f32 %v904, %v1028
        %v1030 = vpop.f32.mrf.mxu0
        %v1031 = vpop.f32.mrf.mxu0
        %v1032 = vadd.f32 %v904, %v1031
        %v1033 = vpop.f32.mrf.mxu0
        %1034 = vmatprep.mubr.bf16.mxu0 0
        %1035 = vmatmul.mubr.bf16.gmra.mxu0 %v871
        %v1036 = vpop.f32.mrf.mxu0
        %v1037 = vadd.f32 %v904, %v1036
        %v1038 = vpop.f32.mrf.mxu0
        %v1039 = vpop.f32.mrf.mxu0
        %v1040 = vadd.f32 %v904, %v1039
        %v1041 = vpop.f32.mrf.mxu0
        %1042 = vmatprep.mubr.bf16.mxu0 0
        %1043 = vmatmul.mubr.bf16.gmra.mxu0 %v872
        %v1044 = vpop.f32.mrf.mxu0
        %v1045 = vadd.f32 %v904, %v1044
        %v1046 = vpop.f32.mrf.mxu0
        %v1047 = vpop.f32.mrf.mxu0
        %v1048 = vadd.f32 %v904, %v1047
        %v1049 = vpop.f32.mrf.mxu0
        %1050 = vmatprep.mubr.bf16.mxu0 0
        %1051 = vmatmul.mubr.bf16.gmra.mxu0 %v873
        %v1052 = vpop.f32.mrf.mxu0
        %v1053 = vadd.f32 %v904, %v1052
        %v1054 = vpop.f32.mrf.mxu0
        %v1055 = vpop.f32.mrf.mxu0
        %v1056 = vadd.f32 %v904, %v1055
        %v1057 = vpop.f32.mrf.mxu0
        %1058 = vmatprep.mubr.bf16.mxu0 0
        %1059 = vmatmul.mubr.bf16.gmra.mxu0 %v874
        %v1060 = vpop.f32.mrf.mxu0
        %v1061 = vadd.f32 %v904, %v1060
        %v1062 = vpop.f32.mrf.mxu0
        %v1063 = vpop.f32.mrf.mxu0
        %v1064 = vadd.f32 %v904, %v1063
        %v1065 = vpop.f32.mrf.mxu0
        %1066 = vmatprep.mubr.bf16.mxu0 0
        %1067 = vmatmul.mubr.bf16.gmra.mxu0 %v875
        %v1068 = vpop.f32.mrf.mxu0
        %v1069 = vadd.f32 %v904, %v1068
        %v1070 = vpop.f32.mrf.mxu0
        %v1071 = vpop.f32.mrf.mxu0
        %v1072 = vadd.f32 %v904, %v1071
        %v1073 = vpop.f32.mrf.mxu0
        %1074 = vmatprep.mubr.bf16.mxu0 0
        %1075 = vmatmul.mubr.bf16.gmra.mxu0 %v876
        %v1076 = vpop.f32.mrf.mxu0
        %v1077 = vadd.f32 %v904, %v1076
        %v1078 = vpop.f32.mrf.mxu0
        %v1079 = vpop.f32.mrf.mxu0
        %v1080 = vadd.f32 %v904, %v1079
        %v1081 = vpop.f32.mrf.mxu0
        %1082 = vmatprep.mubr.bf16.mxu0 0
        %1083 = vmatmul.mubr.bf16.gmra.mxu0 %v877
        %v1084 = vpop.f32.mrf.mxu0
        %v1085 = vadd.f32 %v904, %v1084
        %v1086 = vpop.f32.mrf.mxu0
        %v1087 = vpop.f32.mrf.mxu0
        %v1088 = vadd.f32 %v904, %v1087
        %v1089 = vpop.f32.mrf.mxu0
        %1090 = vmatprep.mubr.bf16.mxu0 0
        %1091 = vmatmul.mubr.bf16.gmra.mxu0 %v878
        %v1092 = vpop.f32.mrf.mxu0
        %v1093 = vadd.f32 %v904, %v1092
        %v1094 = vpop.f32.mrf.mxu0
        %v1095 = vpop.f32.mrf.mxu0
        %v1096 = vadd.f32 %v904, %v1095
        %v1097 = vpop.f32.mrf.mxu0
        %1098 = vmatprep.mubr.bf16.mxu0 0
        %1099 = vmatmul.mubr.bf16.gmra.mxu0 %v879
        %v1100 = vpop.f32.mrf.mxu0
        %v1101 = vadd.f32 %v904, %v1100
        %v1102 = vpop.f32.mrf.mxu0
        %v1103 = vpop.f32.mrf.mxu0
        %v1104 = vadd.f32 %v904, %v1103
        %v1105 = vpop.f32.mrf.mxu0
        %1106 = vmatprep.mubr.bf16.mxu0 0
        %1107 = vmatmul.mubr.bf16.gmra.mxu0 %v880
        %v1108 = vpop.f32.mrf.mxu0
        %v1109 = vadd.f32 %v904, %v1108
        %v1110 = vpop.f32.mrf.mxu0
        %v1111 = vpop.f32.mrf.mxu0
        %v1112 = vadd.f32 %v904, %v1111
        %v1113 = vpop.f32.mrf.mxu0
        %1114 = vdwg.mxu0
        %v1115 = vtanh.pop %v989
        %v1116 = vtanh.pop %v992
        %v1117 = vtanh.pop %v997
        %v1118 = vtanh.pop %v1000
        %v1119 = vtanh.pop %v1005
        %v1120 = vtanh.pop %v1008
        %v1121 = vtanh.pop %v1013
        %v1122 = vtanh.pop %v1016
        %v1123 = vtanh.pop %v1021
        %v1124 = vtanh.pop %v1024
        %v1125 = vtanh.pop %v1029
        %v1126 = vtanh.pop %v1032
        %v1127 = vtanh.pop %v1037
        %v1128 = vtanh.pop %v1040
        %v1129 = vtanh.pop %v1045
        %v1130 = vtanh.pop %v1048
        %v1131 = vtanh.pop %v1053
        %v1132 = vtanh.pop %v1056
        %v1133 = vtanh.pop %v1061
        %v1134 = vtanh.pop %v1064
        %v1135 = vtanh.pop %v1069
        %v1136 = vtanh.pop %v1072
        %v1137 = vtanh.pop %v1077
        %v1138 = vtanh.pop %v1080
        %v1139 = vtanh.pop %v1085
        %v1140 = vtanh.pop %v1088
        %v1141 = vtanh.pop %v1093
        %v1142 = vtanh.pop %v1096
        %v1143 = vtanh.pop %v1101
        %v1144 = vtanh.pop %v1104
        %v1145 = vtanh.pop %v1109
        %v1146 = vtanh.pop %v1112
        %v1147 = vpack.c.bf16 %v1116, %v1115
        %v1148 = vpack.c.bf16 %v1118, %v1117
        %v1149 = vpack.c.bf16 %v1120, %v1119
        %v1150 = vpack.c.bf16 %v1122, %v1121
        %v1151 = vpack.c.bf16 %v1124, %v1123
        %v1152 = vpack.c.bf16 %v1126, %v1125
        %v1153 = vpack.c.bf16 %v1128, %v1127
        %v1154 = vpack.c.bf16 %v1130, %v1129
        %v1155 = vpack.c.bf16 %v1132, %v1131
        %v1156 = vpack.c.bf16 %v1134, %v1133
        %v1157 = vpack.c.bf16 %v1136, %v1135
        %v1158 = vpack.c.bf16 %v1138, %v1137
        %v1159 = vpack.c.bf16 %v1140, %v1139
        %v1160 = vpack.c.bf16 %v1142, %v1141
        %v1161 = vpack.c.bf16 %v1144, %v1143
        %v1162 = vpack.c.bf16 %v1146, %v1145
        %s1163 = scalar_lea.vmem [#allocation2], 128
        %v1164 = vld [vmem:[%s1163] sm:$0xf]
        %v1165 = vld [vmem:[%s1163 + $0x4] sm:$0xf]
        %v1166 = vld [vmem:[%s1163 + $0x8] sm:$0xf]
        %v1167 = vld [vmem:[%s1163 + $0xc] sm:$0xf]
        %v1168 = vld [vmem:[%s1163 + $0x10] sm:$0xf]
        %v1169 = vld [vmem:[%s1163 + $0x14] sm:$0xf]
        %v1170 = vld [vmem:[%s1163 + $0x18] sm:$0xf]
        %v1171 = vld [vmem:[%s1163 + $0x1c] sm:$0xf]
        %v1172 = vld [vmem:[%s1163 + $0x20] sm:$0xf]
        %v1173 = vld [vmem:[%s1163 + $0x24] sm:$0xf]
        %v1174 = vld [vmem:[%s1163 + $0x28] sm:$0xf]
        %v1175 = vld [vmem:[%s1163 + $0x2c] sm:$0xf]
        %v1176 = vld [vmem:[%s1163 + $0x30] sm:$0xf]
        %v1177 = vld [vmem:[%s1163 + $0x34] sm:$0xf]
        %v1178 = vld [vmem:[%s1163 + $0x38] sm:$0xf]
        %v1179 = vld [vmem:[%s1163 + $0x3c] sm:$0xf]
        %s1180 = scalar_lea.vmem %s3, 3
        %v1181 = vld [vmem:[%s1180] sm:$0x1]
        %v1183 = vlaneseq
        %v1184 = vshrl.u32 %v1183, 7
        %v1185 = vsub.s32 0, %v1184
        %v1186 = vrot.slane %v1181, %v1185
        %v1204 = vunpack.c.l.b16 %v1164
        %v1205 = vunpack.c.l.b16 %v1165
        %v1206 = vunpack.c.l.b16 %v1166
        %v1207 = vunpack.c.l.b16 %v1167
        %v1208 = vunpack.c.l.b16 %v1168
        %v1209 = vunpack.c.l.b16 %v1169
        %v1210 = vunpack.c.l.b16 %v1170
        %v1211 = vunpack.c.l.b16 %v1171
        %v1212 = vunpack.c.l.b16 %v1172
        %v1213 = vunpack.c.l.b16 %v1173
        %v1214 = vunpack.c.l.b16 %v1174
        %v1215 = vunpack.c.l.b16 %v1175
        %v1216 = vunpack.c.l.b16 %v1176
        %v1217 = vunpack.c.l.b16 %v1177
        %v1218 = vunpack.c.l.b16 %v1178
        %v1219 = vunpack.c.l.b16 %v1179
        %v1220 = vpack.c.b16 %v1205, %v1204
        %v1221 = vpack.c.b16 %v1207, %v1206
        %v1222 = vpack.c.b16 %v1209, %v1208
        %v1223 = vpack.c.b16 %v1211, %v1210
        %v1224 = vpack.c.b16 %v1213, %v1212
        %v1225 = vpack.c.b16 %v1215, %v1214
        %v1226 = vpack.c.b16 %v1217, %v1216
        %v1227 = vpack.c.b16 %v1219, %v1218
        %1236 = vmatprep.subr.bf16.mxu0 0
        %1237 = vmatpush1.bf16.msra.mxu0 %v1227
        %1238 = vmatprep.subr.bf16.mxu0 0
        %1239 = vmatpush1.bf16.msra.mxu0 %v1226
        %1240 = vmatprep.subr.bf16.mxu0 0
        %1241 = vmatpush1.bf16.msra.mxu0 %v1225
        %1242 = vmatprep.subr.bf16.mxu0 0
        %1243 = vmatpush1.bf16.msra.mxu0 %v1224
        %1244 = vmatprep.subr.bf16.mxu0 0
        %1245 = vmatpush1.bf16.msra.mxu0 %v1223
        %1246 = vmatprep.subr.bf16.mxu0 0
        %1247 = vmatpush1.bf16.msra.mxu0 %v1222
        %1248 = vmatprep.subr.bf16.mxu0 0
        %1249 = vmatpush1.bf16.msra.mxu0 %v1221
        %1250 = vmatprep.subr.bf16.mxu0 0
        %1251 = vmatpush1.bf16.msra.mxu0 %v1220
        %1252 = vmatprep.subr.bf16.mxu0 0
        %1253 = vmatpush2.bf16.msra.mxu0 0
        %1254 = vmatprep.subr.bf16.mxu0 0
        %1255 = vmatpush2.bf16.msra.mxu0 0
        %1256 = vmatprep.subr.bf16.mxu0 0
        %1257 = vmatpush2.bf16.msra.mxu0 0
        %1258 = vmatprep.subr.bf16.mxu0 0
        %1259 = vmatpush2.bf16.msra.mxu0 0
        %1260 = vmatprep.subr.bf16.mxu0 0
        %1261 = vmatpush2.bf16.msra.mxu0 0
        %1262 = vmatprep.subr.bf16.mxu0 0
        %1263 = vmatpush2.bf16.msra.mxu0 0
        %1264 = vmatprep.subr.bf16.mxu0 0
        %1265 = vmatpush2.bf16.msra.mxu0 0
        %1266 = vmatprep.subr.bf16.mxu0 0
        %1267 = vmatpush2.bf16.msra.mxu0 0
        %1268 = vmatprep.mubr.bf16.mxu0 0
        %1269 = vmatmul.mubr.bf16.gmra.mxu0 %v1147
        %v1270 = vpop.f32.mrf.mxu0
        %v1271 = vadd.f32 %v1186, %v1270
        %v1272 = vpop.f32.mrf.mxu0
        %v1273 = vpop.f32.mrf.mxu0
        %v1274 = vadd.f32 %v1186, %v1273
        %v1275 = vpop.f32.mrf.mxu0
        %1276 = vmatprep.mubr.bf16.mxu0 0
        %1277 = vmatmul.mubr.bf16.gmra.mxu0 %v1148
        %v1278 = vpop.f32.mrf.mxu0
        %v1279 = vadd.f32 %v1186, %v1278
        %v1280 = vpop.f32.mrf.mxu0
        %v1281 = vpop.f32.mrf.mxu0
        %v1282 = vadd.f32 %v1186, %v1281
        %v1283 = vpop.f32.mrf.mxu0
        %1284 = vmatprep.mubr.bf16.mxu0 0
        %1285 = vmatmul.mubr.bf16.gmra.mxu0 %v1149
        %v1286 = vpop.f32.mrf.mxu0
        %v1287 = vadd.f32 %v1186, %v1286
        %v1288 = vpop.f32.mrf.mxu0
        %v1289 = vpop.f32.mrf.mxu0
        %v1290 = vadd.f32 %v1186, %v1289
        %v1291 = vpop.f32.mrf.mxu0
        %1292 = vmatprep.mubr.bf16.mxu0 0
        %1293 = vmatmul.mubr.bf16.gmra.mxu0 %v1150
        %v1294 = vpop.f32.mrf.mxu0
        %v1295 = vadd.f32 %v1186, %v1294
        %v1296 = vpop.f32.mrf.mxu0
        %v1297 = vpop.f32.mrf.mxu0
        %v1298 = vadd.f32 %v1186, %v1297
        %v1299 = vpop.f32.mrf.mxu0
        %1300 = vmatprep.mubr.bf16.mxu0 0
        %1301 = vmatmul.mubr.bf16.gmra.mxu0 %v1151
        %v1302 = vpop.f32.mrf.mxu0
        %v1303 = vadd.f32 %v1186, %v1302
        %v1304 = vpop.f32.mrf.mxu0
        %v1305 = vpop.f32.mrf.mxu0
        %v1306 = vadd.f32 %v1186, %v1305
        %v1307 = vpop.f32.mrf.mxu0
        %1308 = vmatprep.mubr.bf16.mxu0 0
        %1309 = vmatmul.mubr.bf16.gmra.mxu0 %v1152
        %v1310 = vpop.f32.mrf.mxu0
        %v1311 = vadd.f32 %v1186, %v1310
        %v1312 = vpop.f32.mrf.mxu0
        %v1313 = vpop.f32.mrf.mxu0
        %v1314 = vadd.f32 %v1186, %v1313
        %v1315 = vpop.f32.mrf.mxu0
        %1316 = vmatprep.mubr.bf16.mxu0 0
        %1317 = vmatmul.mubr.bf16.gmra.mxu0 %v1153
        %v1318 = vpop.f32.mrf.mxu0
        %v1319 = vadd.f32 %v1186, %v1318
        %v1320 = vpop.f32.mrf.mxu0
        %v1321 = vpop.f32.mrf.mxu0
        %v1322 = vadd.f32 %v1186, %v1321
        %v1323 = vpop.f32.mrf.mxu0
        %1324 = vmatprep.mubr.bf16.mxu0 0
        %1325 = vmatmul.mubr.bf16.gmra.mxu0 %v1154
        %v1326 = vpop.f32.mrf.mxu0
        %v1327 = vadd.f32 %v1186, %v1326
        %v1328 = vpop.f32.mrf.mxu0
        %v1329 = vpop.f32.mrf.mxu0
        %v1330 = vadd.f32 %v1186, %v1329
        %v1331 = vpop.f32.mrf.mxu0
        %1332 = vmatprep.mubr.bf16.mxu0 0
        %1333 = vmatmul.mubr.bf16.gmra.mxu0 %v1155
        %v1334 = vpop.f32.mrf.mxu0
        %v1335 = vadd.f32 %v1186, %v1334
        %v1336 = vpop.f32.mrf.mxu0
        %v1337 = vpop.f32.mrf.mxu0
        %v1338 = vadd.f32 %v1186, %v1337
        %v1339 = vpop.f32.mrf.mxu0
        %1340 = vmatprep.mubr.bf16.mxu0 0
        %1341 = vmatmul.mubr.bf16.gmra.mxu0 %v1156
        %v1342 = vpop.f32.mrf.mxu0
        %v1343 = vadd.f32 %v1186, %v1342
        %v1344 = vpop.f32.mrf.mxu0
        %v1345 = vpop.f32.mrf.mxu0
        %v1346 = vadd.f32 %v1186, %v1345
        %v1347 = vpop.f32.mrf.mxu0
        %1348 = vmatprep.mubr.bf16.mxu0 0
        %1349 = vmatmul.mubr.bf16.gmra.mxu0 %v1157
        %v1350 = vpop.f32.mrf.mxu0
        %v1351 = vadd.f32 %v1186, %v1350
        %v1352 = vpop.f32.mrf.mxu0
        %v1353 = vpop.f32.mrf.mxu0
        %v1354 = vadd.f32 %v1186, %v1353
        %v1355 = vpop.f32.mrf.mxu0
        %1356 = vmatprep.mubr.bf16.mxu0 0
        %1357 = vmatmul.mubr.bf16.gmra.mxu0 %v1158
        %v1358 = vpop.f32.mrf.mxu0
        %v1359 = vadd.f32 %v1186, %v1358
        %v1360 = vpop.f32.mrf.mxu0
        %v1361 = vpop.f32.mrf.mxu0
        %v1362 = vadd.f32 %v1186, %v1361
        %v1363 = vpop.f32.mrf.mxu0
        %1364 = vmatprep.mubr.bf16.mxu0 0
        %1365 = vmatmul.mubr.bf16.gmra.mxu0 %v1159
        %v1366 = vpop.f32.mrf.mxu0
        %v1367 = vadd.f32 %v1186, %v1366
        %v1368 = vpop.f32.mrf.mxu0
        %v1369 = vpop.f32.mrf.mxu0
        %v1370 = vadd.f32 %v1186, %v1369
        %v1371 = vpop.f32.mrf.mxu0
        %1372 = vmatprep.mubr.bf16.mxu0 0
        %1373 = vmatmul.mubr.bf16.gmra.mxu0 %v1160
        %v1374 = vpop.f32.mrf.mxu0
        %v1375 = vadd.f32 %v1186, %v1374
        %v1376 = vpop.f32.mrf.mxu0
        %v1377 = vpop.f32.mrf.mxu0
        %v1378 = vadd.f32 %v1186, %v1377
        %v1379 = vpop.f32.mrf.mxu0
        %1380 = vmatprep.mubr.bf16.mxu0 0
        %1381 = vmatmul.mubr.bf16.gmra.mxu0 %v1161
        %v1382 = vpop.f32.mrf.mxu0
        %v1383 = vadd.f32 %v1186, %v1382
        %v1384 = vpop.f32.mrf.mxu0
        %v1385 = vpop.f32.mrf.mxu0
        %v1386 = vadd.f32 %v1186, %v1385
        %v1387 = vpop.f32.mrf.mxu0
        %1388 = vmatprep.mubr.bf16.mxu0 0
        %1389 = vmatmul.mubr.bf16.gmra.mxu0 %v1162
        %v1390 = vpop.f32.mrf.mxu0
        %v1391 = vadd.f32 %v1186, %v1390
        %v1392 = vpop.f32.mrf.mxu0
        %v1393 = vpop.f32.mrf.mxu0
        %v1394 = vadd.f32 %v1186, %v1393
        %v1395 = vpop.f32.mrf.mxu0
        %1396 = vdwg.mxu0
        %v1397 = vtanh.pop %v1271
        %v1398 = vtanh.pop %v1274
        %v1399 = vtanh.pop %v1279
        %v1400 = vtanh.pop %v1282
        %v1401 = vtanh.pop %v1287
        %v1402 = vtanh.pop %v1290
        %v1403 = vtanh.pop %v1295
        %v1404 = vtanh.pop %v1298
        %v1405 = vtanh.pop %v1303
        %v1406 = vtanh.pop %v1306
        %v1407 = vtanh.pop %v1311
        %v1408 = vtanh.pop %v1314
        %v1409 = vtanh.pop %v1319
        %v1410 = vtanh.pop %v1322
        %v1411 = vtanh.pop %v1327
        %v1412 = vtanh.pop %v1330
        %v1413 = vtanh.pop %v1335
        %v1414 = vtanh.pop %v1338
        %v1415 = vtanh.pop %v1343
        %v1416 = vtanh.pop %v1346
        %v1417 = vtanh.pop %v1351
        %v1418 = vtanh.pop %v1354
        %v1419 = vtanh.pop %v1359
        %v1420 = vtanh.pop %v1362
        %v1421 = vtanh.pop %v1367
        %v1422 = vtanh.pop %v1370
        %v1423 = vtanh.pop %v1375
        %v1424 = vtanh.pop %v1378
        %v1425 = vtanh.pop %v1383
        %v1426 = vtanh.pop %v1386
        %v1427 = vtanh.pop %v1391
        %v1428 = vtanh.pop %v1394
        %v1429 = vpack.c.bf16 %v1398, %v1397
        %v1430 = vpack.c.bf16 %v1400, %v1399
        %v1431 = vpack.c.bf16 %v1402, %v1401
        %v1432 = vpack.c.bf16 %v1404, %v1403
        %v1433 = vpack.c.bf16 %v1406, %v1405
        %v1434 = vpack.c.bf16 %v1408, %v1407
        %v1435 = vpack.c.bf16 %v1410, %v1409
        %v1436 = vpack.c.bf16 %v1412, %v1411
        %v1437 = vpack.c.bf16 %v1414, %v1413
        %v1438 = vpack.c.bf16 %v1416, %v1415
        %v1439 = vpack.c.bf16 %v1418, %v1417
        %v1440 = vpack.c.bf16 %v1420, %v1419
        %v1441 = vpack.c.bf16 %v1422, %v1421
        %v1442 = vpack.c.bf16 %v1424, %v1423
        %v1443 = vpack.c.bf16 %v1426, %v1425
        %v1444 = vpack.c.bf16 %v1428, %v1427
        %s1445 = scalar_lea.vmem [#allocation2], 192
        %v1446 = vld [vmem:[%s1445] sm:$0xf]
        %v1447 = vld [vmem:[%s1445 + $0x4] sm:$0xf]
        %v1448 = vld [vmem:[%s1445 + $0x8] sm:$0xf]
        %v1449 = vld [vmem:[%s1445 + $0xc] sm:$0xf]
        %v1450 = vld [vmem:[%s1445 + $0x10] sm:$0xf]
        %v1451 = vld [vmem:[%s1445 + $0x14] sm:$0xf]
        %v1452 = vld [vmem:[%s1445 + $0x18] sm:$0xf]
        %v1453 = vld [vmem:[%s1445 + $0x1c] sm:$0xf]
        %v1454 = vld [vmem:[%s1445 + $0x20] sm:$0xf]
        %v1455 = vld [vmem:[%s1445 + $0x24] sm:$0xf]
        %v1456 = vld [vmem:[%s1445 + $0x28] sm:$0xf]
        %v1457 = vld [vmem:[%s1445 + $0x2c] sm:$0xf]
        %v1458 = vld [vmem:[%s1445 + $0x30] sm:$0xf]
        %v1459 = vld [vmem:[%s1445 + $0x34] sm:$0xf]
        %v1460 = vld [vmem:[%s1445 + $0x38] sm:$0xf]
        %v1461 = vld [vmem:[%s1445 + $0x3c] sm:$0xf]
        %s1462 = scalar_lea.vmem %s3, 4
        %v1463 = vld [vmem:[%s1462] sm:$0x1]
        %v1465 = vlaneseq
        %v1466 = vshrl.u32 %v1465, 7
        %v1467 = vsub.s32 0, %v1466
        %v1468 = vrot.slane %v1463, %v1467
        %v1486 = vunpack.c.l.b16 %v1446
        %v1487 = vunpack.c.l.b16 %v1447
        %v1488 = vunpack.c.l.b16 %v1448
        %v1489 = vunpack.c.l.b16 %v1449
        %v1490 = vunpack.c.l.b16 %v1450
        %v1491 = vunpack.c.l.b16 %v1451
        %v1492 = vunpack.c.l.b16 %v1452
        %v1493 = vunpack.c.l.b16 %v1453
        %v1494 = vunpack.c.l.b16 %v1454
        %v1495 = vunpack.c.l.b16 %v1455
        %v1496 = vunpack.c.l.b16 %v1456
        %v1497 = vunpack.c.l.b16 %v1457
        %v1498 = vunpack.c.l.b16 %v1458
        %v1499 = vunpack.c.l.b16 %v1459
        %v1500 = vunpack.c.l.b16 %v1460
        %v1501 = vunpack.c.l.b16 %v1461
        %v1502 = vpack.c.b16 %v1487, %v1486
        %v1503 = vpack.c.b16 %v1489, %v1488
        %v1504 = vpack.c.b16 %v1491, %v1490
        %v1505 = vpack.c.b16 %v1493, %v1492
        %v1506 = vpack.c.b16 %v1495, %v1494
        %v1507 = vpack.c.b16 %v1497, %v1496
        %v1508 = vpack.c.b16 %v1499, %v1498
        %v1509 = vpack.c.b16 %v1501, %v1500
        %1518 = vmatprep.subr.bf16.mxu0 0
        %1519 = vmatpush1.bf16.msra.mxu0 %v1509
        %1520 = vmatprep.subr.bf16.mxu0 0
        %1521 = vmatpush1.bf16.msra.mxu0 %v1508
        %1522 = vmatprep.subr.bf16.mxu0 0
        %1523 = vmatpush1.bf16.msra.mxu0 %v1507
        %1524 = vmatprep.subr.bf16.mxu0 0
        %1525 = vmatpush1.bf16.msra.mxu0 %v1506
        %1526 = vmatprep.subr.bf16.mxu0 0
        %1527 = vmatpush1.bf16.msra.mxu0 %v1505
        %1528 = vmatprep.subr.bf16.mxu0 0
        %1529 = vmatpush1.bf16.msra.mxu0 %v1504
        %1530 = vmatprep.subr.bf16.mxu0 0
        %1531 = vmatpush1.bf16.msra.mxu0 %v1503
        %1532 = vmatprep.subr.bf16.mxu0 0
        %1533 = vmatpush1.bf16.msra.mxu0 %v1502
        %1534 = vmatprep.subr.bf16.mxu0 0
        %1535 = vmatpush2.bf16.msra.mxu0 0
        %1536 = vmatprep.subr.bf16.mxu0 0
        %1537 = vmatpush2.bf16.msra.mxu0 0
        %1538 = vmatprep.subr.bf16.mxu0 0
        %1539 = vmatpush2.bf16.msra.mxu0 0
        %1540 = vmatprep.subr.bf16.mxu0 0
        %1541 = vmatpush2.bf16.msra.mxu0 0
        %1542 = vmatprep.subr.bf16.mxu0 0
        %1543 = vmatpush2.bf16.msra.mxu0 0
        %1544 = vmatprep.subr.bf16.mxu0 0
        %1545 = vmatpush2.bf16.msra.mxu0 0
        %1546 = vmatprep.subr.bf16.mxu0 0
        %1547 = vmatpush2.bf16.msra.mxu0 0
        %1548 = vmatprep.subr.bf16.mxu0 0
        %1549 = vmatpush2.bf16.msra.mxu0 0
        %1550 = vmatprep.mubr.bf16.mxu0 0
        %1551 = vmatmul.mubr.bf16.gmra.mxu0 %v1429
        %v1552 = vpop.f32.mrf.mxu0
        %v1553 = vadd.f32 %v1468, %v1552
        %v1554 = vpop.f32.mrf.mxu0
        %v1555 = vpop.f32.mrf.mxu0
        %v1556 = vadd.f32 %v1468, %v1555
        %v1557 = vpop.f32.mrf.mxu0
        %1558 = vmatprep.mubr.bf16.mxu0 0
        %1559 = vmatmul.mubr.bf16.gmra.mxu0 %v1430
        %v1560 = vpop.f32.mrf.mxu0
        %v1561 = vadd.f32 %v1468, %v1560
        %v1562 = vpop.f32.mrf.mxu0
        %v1563 = vpop.f32.mrf.mxu0
        %v1564 = vadd.f32 %v1468, %v1563
        %v1565 = vpop.f32.mrf.mxu0
        %1566 = vmatprep.mubr.bf16.mxu0 0
        %1567 = vmatmul.mubr.bf16.gmra.mxu0 %v1431
        %v1568 = vpop.f32.mrf.mxu0
        %v1569 = vadd.f32 %v1468, %v1568
        %v1570 = vpop.f32.mrf.mxu0
        %v1571 = vpop.f32.mrf.mxu0
        %v1572 = vadd.f32 %v1468, %v1571
        %v1573 = vpop.f32.mrf.mxu0
        %1574 = vmatprep.mubr.bf16.mxu0 0
        %1575 = vmatmul.mubr.bf16.gmra.mxu0 %v1432
        %v1576 = vpop.f32.mrf.mxu0
        %v1577 = vadd.f32 %v1468, %v1576
        %v1578 = vpop.f32.mrf.mxu0
        %v1579 = vpop.f32.mrf.mxu0
        %v1580 = vadd.f32 %v1468, %v1579
        %v1581 = vpop.f32.mrf.mxu0
        %1582 = vmatprep.mubr.bf16.mxu0 0
        %1583 = vmatmul.mubr.bf16.gmra.mxu0 %v1433
        %v1584 = vpop.f32.mrf.mxu0
        %v1585 = vadd.f32 %v1468, %v1584
        %v1586 = vpop.f32.mrf.mxu0
        %v1587 = vpop.f32.mrf.mxu0
        %v1588 = vadd.f32 %v1468, %v1587
        %v1589 = vpop.f32.mrf.mxu0
        %1590 = vmatprep.mubr.bf16.mxu0 0
        %1591 = vmatmul.mubr.bf16.gmra.mxu0 %v1434
        %v1592 = vpop.f32.mrf.mxu0
        %v1593 = vadd.f32 %v1468, %v1592
        %v1594 = vpop.f32.mrf.mxu0
        %v1595 = vpop.f32.mrf.mxu0
        %v1596 = vadd.f32 %v1468, %v1595
        %v1597 = vpop.f32.mrf.mxu0
        %1598 = vmatprep.mubr.bf16.mxu0 0
        %1599 = vmatmul.mubr.bf16.gmra.mxu0 %v1435
        %v1600 = vpop.f32.mrf.mxu0
        %v1601 = vadd.f32 %v1468, %v1600
        %v1602 = vpop.f32.mrf.mxu0
        %v1603 = vpop.f32.mrf.mxu0
        %v1604 = vadd.f32 %v1468, %v1603
        %v1605 = vpop.f32.mrf.mxu0
        %1606 = vmatprep.mubr.bf16.mxu0 0
        %1607 = vmatmul.mubr.bf16.gmra.mxu0 %v1436
        %v1608 = vpop.f32.mrf.mxu0
        %v1609 = vadd.f32 %v1468, %v1608
        %v1610 = vpop.f32.mrf.mxu0
        %v1611 = vpop.f32.mrf.mxu0
        %v1612 = vadd.f32 %v1468, %v1611
        %v1613 = vpop.f32.mrf.mxu0
        %1614 = vmatprep.mubr.bf16.mxu0 0
        %1615 = vmatmul.mubr.bf16.gmra.mxu0 %v1437
        %v1616 = vpop.f32.mrf.mxu0
        %v1617 = vadd.f32 %v1468, %v1616
        %v1618 = vpop.f32.mrf.mxu0
        %v1619 = vpop.f32.mrf.mxu0
        %v1620 = vadd.f32 %v1468, %v1619
        %v1621 = vpop.f32.mrf.mxu0
        %1622 = vmatprep.mubr.bf16.mxu0 0
        %1623 = vmatmul.mubr.bf16.gmra.mxu0 %v1438
        %v1624 = vpop.f32.mrf.mxu0
        %v1625 = vadd.f32 %v1468, %v1624
        %v1626 = vpop.f32.mrf.mxu0
        %v1627 = vpop.f32.mrf.mxu0
        %v1628 = vadd.f32 %v1468, %v1627
        %v1629 = vpop.f32.mrf.mxu0
        %1630 = vmatprep.mubr.bf16.mxu0 0
        %1631 = vmatmul.mubr.bf16.gmra.mxu0 %v1439
        %v1632 = vpop.f32.mrf.mxu0
        %v1633 = vadd.f32 %v1468, %v1632
        %v1634 = vpop.f32.mrf.mxu0
        %v1635 = vpop.f32.mrf.mxu0
        %v1636 = vadd.f32 %v1468, %v1635
        %v1637 = vpop.f32.mrf.mxu0
        %1638 = vmatprep.mubr.bf16.mxu0 0
        %1639 = vmatmul.mubr.bf16.gmra.mxu0 %v1440
        %v1640 = vpop.f32.mrf.mxu0
        %v1641 = vadd.f32 %v1468, %v1640
        %v1642 = vpop.f32.mrf.mxu0
        %v1643 = vpop.f32.mrf.mxu0
        %v1644 = vadd.f32 %v1468, %v1643
        %v1645 = vpop.f32.mrf.mxu0
        %1646 = vmatprep.mubr.bf16.mxu0 0
        %1647 = vmatmul.mubr.bf16.gmra.mxu0 %v1441
        %v1648 = vpop.f32.mrf.mxu0
        %v1649 = vadd.f32 %v1468, %v1648
        %v1650 = vpop.f32.mrf.mxu0
        %v1651 = vpop.f32.mrf.mxu0
        %v1652 = vadd.f32 %v1468, %v1651
        %v1653 = vpop.f32.mrf.mxu0
        %1654 = vmatprep.mubr.bf16.mxu0 0
        %1655 = vmatmul.mubr.bf16.gmra.mxu0 %v1442
        %v1656 = vpop.f32.mrf.mxu0
        %v1657 = vadd.f32 %v1468, %v1656
        %v1658 = vpop.f32.mrf.mxu0
        %v1659 = vpop.f32.mrf.mxu0
        %v1660 = vadd.f32 %v1468, %v1659
        %v1661 = vpop.f32.mrf.mxu0
        %1662 = vmatprep.mubr.bf16.mxu0 0
        %1663 = vmatmul.mubr.bf16.gmra.mxu0 %v1443
        %v1664 = vpop.f32.mrf.mxu0
        %v1665 = vadd.f32 %v1468, %v1664
        %v1666 = vpop.f32.mrf.mxu0
        %v1667 = vpop.f32.mrf.mxu0
        %v1668 = vadd.f32 %v1468, %v1667
        %v1669 = vpop.f32.mrf.mxu0
        %1670 = vmatprep.mubr.bf16.mxu0 0
        %1671 = vmatmul.mubr.bf16.gmra.mxu0 %v1444
        %v1672 = vpop.f32.mrf.mxu0
        %v1673 = vadd.f32 %v1468, %v1672
        %v1674 = vpop.f32.mrf.mxu0
        %v1675 = vpop.f32.mrf.mxu0
        %v1676 = vadd.f32 %v1468, %v1675
        %v1677 = vpop.f32.mrf.mxu0
        %1678 = vdwg.mxu0
        %v1679 = vtanh.pop %v1553
        %v1680 = vtanh.pop %v1556
        %v1681 = vtanh.pop %v1561
        %v1682 = vtanh.pop %v1564
        %v1683 = vtanh.pop %v1569
        %v1684 = vtanh.pop %v1572
        %v1685 = vtanh.pop %v1577
        %v1686 = vtanh.pop %v1580
        %v1687 = vtanh.pop %v1585
        %v1688 = vtanh.pop %v1588
        %v1689 = vtanh.pop %v1593
        %v1690 = vtanh.pop %v1596
        %v1691 = vtanh.pop %v1601
        %v1692 = vtanh.pop %v1604
        %v1693 = vtanh.pop %v1609
        %v1694 = vtanh.pop %v1612
        %v1695 = vtanh.pop %v1617
        %v1696 = vtanh.pop %v1620
        %v1697 = vtanh.pop %v1625
        %v1698 = vtanh.pop %v1628
        %v1699 = vtanh.pop %v1633
        %v1700 = vtanh.pop %v1636
        %v1701 = vtanh.pop %v1641
        %v1702 = vtanh.pop %v1644
        %v1703 = vtanh.pop %v1649
        %v1704 = vtanh.pop %v1652
        %v1705 = vtanh.pop %v1657
        %v1706 = vtanh.pop %v1660
        %v1707 = vtanh.pop %v1665
        %v1708 = vtanh.pop %v1668
        %v1709 = vtanh.pop %v1673
        %v1710 = vtanh.pop %v1676
        %v1711 = vpack.c.bf16 %v1680, %v1679
        %v1712 = vpack.c.bf16 %v1682, %v1681
        %v1713 = vpack.c.bf16 %v1684, %v1683
        %v1714 = vpack.c.bf16 %v1686, %v1685
        %v1715 = vpack.c.bf16 %v1688, %v1687
        %v1716 = vpack.c.bf16 %v1690, %v1689
        %v1717 = vpack.c.bf16 %v1692, %v1691
        %v1718 = vpack.c.bf16 %v1694, %v1693
        %v1719 = vpack.c.bf16 %v1696, %v1695
        %v1720 = vpack.c.bf16 %v1698, %v1697
        %v1721 = vpack.c.bf16 %v1700, %v1699
        %v1722 = vpack.c.bf16 %v1702, %v1701
        %v1723 = vpack.c.bf16 %v1704, %v1703
        %v1724 = vpack.c.bf16 %v1706, %v1705
        %v1725 = vpack.c.bf16 %v1708, %v1707
        %v1726 = vpack.c.bf16 %v1710, %v1709
        %s1727 = scalar_lea.vmem [#allocation2], 256
        %v1728 = vld [vmem:[%s1727] sm:$0xf]
        %v1729 = vld [vmem:[%s1727 + $0x4] sm:$0xf]
        %v1730 = vld [vmem:[%s1727 + $0x8] sm:$0xf]
        %v1731 = vld [vmem:[%s1727 + $0xc] sm:$0xf]
        %v1732 = vld [vmem:[%s1727 + $0x10] sm:$0xf]
        %v1733 = vld [vmem:[%s1727 + $0x14] sm:$0xf]
        %v1734 = vld [vmem:[%s1727 + $0x18] sm:$0xf]
        %v1735 = vld [vmem:[%s1727 + $0x1c] sm:$0xf]
        %v1736 = vld [vmem:[%s1727 + $0x20] sm:$0xf]
        %v1737 = vld [vmem:[%s1727 + $0x24] sm:$0xf]
        %v1738 = vld [vmem:[%s1727 + $0x28] sm:$0xf]
        %v1739 = vld [vmem:[%s1727 + $0x2c] sm:$0xf]
        %v1740 = vld [vmem:[%s1727 + $0x30] sm:$0xf]
        %v1741 = vld [vmem:[%s1727 + $0x34] sm:$0xf]
        %v1742 = vld [vmem:[%s1727 + $0x38] sm:$0xf]
        %v1743 = vld [vmem:[%s1727 + $0x3c] sm:$0xf]
        %s1744 = scalar_lea.vmem %s3, 5
        %v1745 = vld [vmem:[%s1744] sm:$0x1]
        %v1747 = vlaneseq
        %v1748 = vshrl.u32 %v1747, 7
        %v1749 = vsub.s32 0, %v1748
        %v1750 = vrot.slane %v1745, %v1749
        %v1768 = vunpack.c.l.b16 %v1728
        %v1769 = vunpack.c.l.b16 %v1729
        %v1770 = vunpack.c.l.b16 %v1730
        %v1771 = vunpack.c.l.b16 %v1731
        %v1772 = vunpack.c.l.b16 %v1732
        %v1773 = vunpack.c.l.b16 %v1733
        %v1774 = vunpack.c.l.b16 %v1734
        %v1775 = vunpack.c.l.b16 %v1735
        %v1776 = vunpack.c.l.b16 %v1736
        %v1777 = vunpack.c.l.b16 %v1737
        %v1778 = vunpack.c.l.b16 %v1738
        %v1779 = vunpack.c.l.b16 %v1739
        %v1780 = vunpack.c.l.b16 %v1740
        %v1781 = vunpack.c.l.b16 %v1741
        %v1782 = vunpack.c.l.b16 %v1742
        %v1783 = vunpack.c.l.b16 %v1743
        %v1784 = vpack.c.b16 %v1769, %v1768
        %v1785 = vpack.c.b16 %v1771, %v1770
        %v1786 = vpack.c.b16 %v1773, %v1772
        %v1787 = vpack.c.b16 %v1775, %v1774
        %v1788 = vpack.c.b16 %v1777, %v1776
        %v1789 = vpack.c.b16 %v1779, %v1778
        %v1790 = vpack.c.b16 %v1781, %v1780
        %v1791 = vpack.c.b16 %v1783, %v1782
        %1800 = vmatprep.subr.bf16.mxu0 0
        %1801 = vmatpush1.bf16.msra.mxu0 %v1791
        %1802 = vmatprep.subr.bf16.mxu0 0
        %1803 = vmatpush1.bf16.msra.mxu0 %v1790
        %1804 = vmatprep.subr.bf16.mxu0 0
        %1805 = vmatpush1.bf16.msra.mxu0 %v1789
        %1806 = vmatprep.subr.bf16.mxu0 0
        %1807 = vmatpush1.bf16.msra.mxu0 %v1788
        %1808 = vmatprep.subr.bf16.mxu0 0
        %1809 = vmatpush1.bf16.msra.mxu0 %v1787
        %1810 = vmatprep.subr.bf16.mxu0 0
        %1811 = vmatpush1.bf16.msra.mxu0 %v1786
        %1812 = vmatprep.subr.bf16.mxu0 0
        %1813 = vmatpush1.bf16.msra.mxu0 %v1785
        %1814 = vmatprep.subr.bf16.mxu0 0
        %1815 = vmatpush1.bf16.msra.mxu0 %v1784
        %1816 = vmatprep.subr.bf16.mxu0 0
        %1817 = vmatpush2.bf16.msra.mxu0 0
        %1818 = vmatprep.subr.bf16.mxu0 0
        %1819 = vmatpush2.bf16.msra.mxu0 0
        %1820 = vmatprep.subr.bf16.mxu0 0
        %1821 = vmatpush2.bf16.msra.mxu0 0
        %1822 = vmatprep.subr.bf16.mxu0 0
        %1823 = vmatpush2.bf16.msra.mxu0 0
        %1824 = vmatprep.subr.bf16.mxu0 0
        %1825 = vmatpush2.bf16.msra.mxu0 0
        %1826 = vmatprep.subr.bf16.mxu0 0
        %1827 = vmatpush2.bf16.msra.mxu0 0
        %1828 = vmatprep.subr.bf16.mxu0 0
        %1829 = vmatpush2.bf16.msra.mxu0 0
        %1830 = vmatprep.subr.bf16.mxu0 0
        %1831 = vmatpush2.bf16.msra.mxu0 0
        %1832 = vmatprep.mubr.bf16.mxu0 0
        %1833 = vmatmul.mubr.bf16.gmra.mxu0 %v1711
        %v1834 = vpop.f32.mrf.mxu0
        %v1835 = vadd.f32 %v1750, %v1834
        %v1836 = vpop.f32.mrf.mxu0
        %v1837 = vpop.f32.mrf.mxu0
        %v1838 = vadd.f32 %v1750, %v1837
        %v1839 = vpop.f32.mrf.mxu0
        %1840 = vmatprep.mubr.bf16.mxu0 0
        %1841 = vmatmul.mubr.bf16.gmra.mxu0 %v1712
        %v1842 = vpop.f32.mrf.mxu0
        %v1843 = vadd.f32 %v1750, %v1842
        %v1844 = vpop.f32.mrf.mxu0
        %v1845 = vpop.f32.mrf.mxu0
        %v1846 = vadd.f32 %v1750, %v1845
        %v1847 = vpop.f32.mrf.mxu0
        %1848 = vmatprep.mubr.bf16.mxu0 0
        %1849 = vmatmul.mubr.bf16.gmra.mxu0 %v1713
        %v1850 = vpop.f32.mrf.mxu0
        %v1851 = vadd.f32 %v1750, %v1850
        %v1852 = vpop.f32.mrf.mxu0
        %v1853 = vpop.f32.mrf.mxu0
        %v1854 = vadd.f32 %v1750, %v1853
        %v1855 = vpop.f32.mrf.mxu0
        %1856 = vmatprep.mubr.bf16.mxu0 0
        %1857 = vmatmul.mubr.bf16.gmra.mxu0 %v1714
        %v1858 = vpop.f32.mrf.mxu0
        %v1859 = vadd.f32 %v1750, %v1858
        %v1860 = vpop.f32.mrf.mxu0
        %v1861 = vpop.f32.mrf.mxu0
        %v1862 = vadd.f32 %v1750, %v1861
        %v1863 = vpop.f32.mrf.mxu0
        %1864 = vmatprep.mubr.bf16.mxu0 0
        %1865 = vmatmul.mubr.bf16.gmra.mxu0 %v1715
        %v1866 = vpop.f32.mrf.mxu0
        %v1867 = vadd.f32 %v1750, %v1866
        %v1868 = vpop.f32.mrf.mxu0
        %v1869 = vpop.f32.mrf.mxu0
        %v1870 = vadd.f32 %v1750, %v1869
        %v1871 = vpop.f32.mrf.mxu0
        %1872 = vmatprep.mubr.bf16.mxu0 0
        %1873 = vmatmul.mubr.bf16.gmra.mxu0 %v1716
        %v1874 = vpop.f32.mrf.mxu0
        %v1875 = vadd.f32 %v1750, %v1874
        %v1876 = vpop.f32.mrf.mxu0
        %v1877 = vpop.f32.mrf.mxu0
        %v1878 = vadd.f32 %v1750, %v1877
        %v1879 = vpop.f32.mrf.mxu0
        %1880 = vmatprep.mubr.bf16.mxu0 0
        %1881 = vmatmul.mubr.bf16.gmra.mxu0 %v1717
        %v1882 = vpop.f32.mrf.mxu0
        %v1883 = vadd.f32 %v1750, %v1882
        %v1884 = vpop.f32.mrf.mxu0
        %v1885 = vpop.f32.mrf.mxu0
        %v1886 = vadd.f32 %v1750, %v1885
        %v1887 = vpop.f32.mrf.mxu0
        %1888 = vmatprep.mubr.bf16.mxu0 0
        %1889 = vmatmul.mubr.bf16.gmra.mxu0 %v1718
        %v1890 = vpop.f32.mrf.mxu0
        %v1891 = vadd.f32 %v1750, %v1890
        %v1892 = vpop.f32.mrf.mxu0
        %v1893 = vpop.f32.mrf.mxu0
        %v1894 = vadd.f32 %v1750, %v1893
        %v1895 = vpop.f32.mrf.mxu0
        %1896 = vmatprep.mubr.bf16.mxu0 0
        %1897 = vmatmul.mubr.bf16.gmra.mxu0 %v1719
        %v1898 = vpop.f32.mrf.mxu0
        %v1899 = vadd.f32 %v1750, %v1898
        %v1900 = vpop.f32.mrf.mxu0
        %v1901 = vpop.f32.mrf.mxu0
        %v1902 = vadd.f32 %v1750, %v1901
        %v1903 = vpop.f32.mrf.mxu0
        %1904 = vmatprep.mubr.bf16.mxu0 0
        %1905 = vmatmul.mubr.bf16.gmra.mxu0 %v1720
        %v1906 = vpop.f32.mrf.mxu0
        %v1907 = vadd.f32 %v1750, %v1906
        %v1908 = vpop.f32.mrf.mxu0
        %v1909 = vpop.f32.mrf.mxu0
        %v1910 = vadd.f32 %v1750, %v1909
        %v1911 = vpop.f32.mrf.mxu0
        %1912 = vmatprep.mubr.bf16.mxu0 0
        %1913 = vmatmul.mubr.bf16.gmra.mxu0 %v1721
        %v1914 = vpop.f32.mrf.mxu0
        %v1915 = vadd.f32 %v1750, %v1914
        %v1916 = vpop.f32.mrf.mxu0
        %v1917 = vpop.f32.mrf.mxu0
        %v1918 = vadd.f32 %v1750, %v1917
        %v1919 = vpop.f32.mrf.mxu0
        %1920 = vmatprep.mubr.bf16.mxu0 0
        %1921 = vmatmul.mubr.bf16.gmra.mxu0 %v1722
        %v1922 = vpop.f32.mrf.mxu0
        %v1923 = vadd.f32 %v1750, %v1922
        %v1924 = vpop.f32.mrf.mxu0
        %v1925 = vpop.f32.mrf.mxu0
        %v1926 = vadd.f32 %v1750, %v1925
        %v1927 = vpop.f32.mrf.mxu0
        %1928 = vmatprep.mubr.bf16.mxu0 0
        %1929 = vmatmul.mubr.bf16.gmra.mxu0 %v1723
        %v1930 = vpop.f32.mrf.mxu0
        %v1931 = vadd.f32 %v1750, %v1930
        %v1932 = vpop.f32.mrf.mxu0
        %v1933 = vpop.f32.mrf.mxu0
        %v1934 = vadd.f32 %v1750, %v1933
        %v1935 = vpop.f32.mrf.mxu0
        %1936 = vmatprep.mubr.bf16.mxu0 0
        %1937 = vmatmul.mubr.bf16.gmra.mxu0 %v1724
        %v1938 = vpop.f32.mrf.mxu0
        %v1939 = vadd.f32 %v1750, %v1938
        %v1940 = vpop.f32.mrf.mxu0
        %v1941 = vpop.f32.mrf.mxu0
        %v1942 = vadd.f32 %v1750, %v1941
        %v1943 = vpop.f32.mrf.mxu0
        %1944 = vmatprep.mubr.bf16.mxu0 0
        %1945 = vmatmul.mubr.bf16.gmra.mxu0 %v1725
        %v1946 = vpop.f32.mrf.mxu0
        %v1947 = vadd.f32 %v1750, %v1946
        %v1948 = vpop.f32.mrf.mxu0
        %v1949 = vpop.f32.mrf.mxu0
        %v1950 = vadd.f32 %v1750, %v1949
        %v1951 = vpop.f32.mrf.mxu0
        %1952 = vmatprep.mubr.bf16.mxu0 0
        %1953 = vmatmul.mubr.bf16.gmra.mxu0 %v1726
        %v1954 = vpop.f32.mrf.mxu0
        %v1955 = vadd.f32 %v1750, %v1954
        %v1956 = vpop.f32.mrf.mxu0
        %v1957 = vpop.f32.mrf.mxu0
        %v1958 = vadd.f32 %v1750, %v1957
        %v1959 = vpop.f32.mrf.mxu0
        %1960 = vdwg.mxu0
        %1961 = vst [vmem:[%s206] sm:$0xff] %v1835
        %1962 = vst [vmem:[%s206 + $0x8] sm:$0xff] %v1838
        %1963 = vst [vmem:[%s206 + $0x10] sm:$0xff] %v1843
        %1964 = vst [vmem:[%s206 + $0x18] sm:$0xff] %v1846
        %1965 = vst [vmem:[%s206 + $0x20] sm:$0xff] %v1851
        %1966 = vst [vmem:[%s206 + $0x28] sm:$0xff] %v1854
        %1967 = vst [vmem:[%s206 + $0x30] sm:$0xff] %v1859
        %1968 = vst [vmem:[%s206 + $0x38] sm:$0xff] %v1862
        %1969 = vst [vmem:[%s206 + $0x40] sm:$0xff] %v1867
        %1970 = vst [vmem:[%s206 + $0x48] sm:$0xff] %v1870
        %1971 = vst [vmem:[%s206 + $0x50] sm:$0xff] %v1875
        %1972 = vst [vmem:[%s206 + $0x58] sm:$0xff] %v1878
        %1973 = vst [vmem:[%s206 + $0x60] sm:$0xff] %v1883
        %1974 = vst [vmem:[%s206 + $0x68] sm:$0xff] %v1886
        %1975 = vst [vmem:[%s206 + $0x70] sm:$0xff] %v1891
        %1976 = vst [vmem:[%s206 + $0x78] sm:$0xff] %v1894
        %1977 = vst [vmem:[%s206 + $0x80] sm:$0xff] %v1899
        %1978 = vst [vmem:[%s206 + $0x88] sm:$0xff] %v1902
        %1979 = vst [vmem:[%s206 + $0x90] sm:$0xff] %v1907
        %1980 = vst [vmem:[%s206 + $0x98] sm:$0xff] %v1910
        %1981 = vst [vmem:[%s206 + $0xa0] sm:$0xff] %v1915
        %1982 = vst [vmem:[%s206 + $0xa8] sm:$0xff] %v1918
        %1983 = vst [vmem:[%s206 + $0xb0] sm:$0xff] %v1923
        %1984 = vst [vmem:[%s206 + $0xb8] sm:$0xff] %v1926
        %1985 = vst [vmem:[%s206 + $0xc0] sm:$0xff] %v1931
        %1986 = vst [vmem:[%s206 + $0xc8] sm:$0xff] %v1934
        %1987 = vst [vmem:[%s206 + $0xd0] sm:$0xff] %v1939
        %1988 = vst [vmem:[%s206 + $0xd8] sm:$0xff] %v1942
        %1989 = vst [vmem:[%s206 + $0xe0] sm:$0xff] %v1947
        %1990 = vst [vmem:[%s206 + $0xe8] sm:$0xff] %v1950
        %1991 = vst [vmem:[%s206 + $0xf0] sm:$0xff] %v1955
        %1992 = vst [vmem:[%s206 + $0xf8] sm:$0xff] %v1958
        %s1993 = sand.u32 %s116, 1
        %s1994 = scalar_lea.sflag [#allocation4], %s1993
        %s1995 = sand.u32 %s116, 1
        %s1996 = smul.addr %s1995, 256
        %s1997 = scalar_lea.vmem [#allocation5], %s1996
        // Predicated region
        $region41: #{tpu_custom_call.1} parent=35 // pred_check
          %p1998 = pneg %p126
        $region42: #{tpu_custom_call.1} parent=35 // pred_check_branch
          %2000 = sbr.rel (%p1998) target = $region44
        $region43: #{tpu_custom_call.1} parent=35 // pred_region
          %s2001 = smul.u32 32, %s19
          %s2003 = ssub.s32 4096, 4096
          %2004 = vsyncadd %s1994, %s2003
          %s2005 = smul.addr %s2001, 128
          %s2006 = scalar_lea.hbm %s4, %s2005
          %s2007 = sshll.u32 %s1997, 4
          %s2008 = int_to_ptr.vmem [resolvable:$true] %s2007
          %2013 = dma.vmem_to_hbm [thread:$0]  %s2008, 4096, %s2006, %s1994, 128, 128, 8
        $region44: #{tpu_custom_call.1} parent=35 // pred_fallthru
          _
      $region36: #{tpu_custom_call.1} parent=5 // pred_fallthru
        _
      %p2014 = scmp.le.s32.totalorder 2, %s14
      // Predicated region
      $region45: #{tpu_custom_call.1} parent=5 // pred_check
        %p2015 = pneg %p2014
      $region46: #{tpu_custom_call.1} parent=5 // pred_check_branch
        %2017 = sbr.rel (%p2015) target = $region48
      $region47: #{tpu_custom_call.1} parent=5 // pred_region
        %s2018 = ssub.s32 %s14, 2
        // Predicated region
        $region49: #{tpu_custom_call.1} parent=47 // pred_check
          %p2019 = pneg %p132
        $region50: #{tpu_custom_call.1} parent=47 // pred_check_branch
          %2021 = sbr.rel (%p2019) target = $region52
        $region51: #{tpu_custom_call.1} parent=47 // pred_region
          %s2022 = sand.u32 %s117, 1
          %s2023 = scalar_lea.sflag [#allocation4], %s2022
          %s2024 = sand.u32 %s117, 1
          %s2025 = smul.addr %s2024, 256
          %s2026 = scalar_lea.vmem [#allocation5], %s2025
          %2027 = dma.done %s2023, 4096
        $region52: #{tpu_custom_call.1} parent=47 // pred_fallthru
          _
      $region48: #{tpu_custom_call.1} parent=5 // pred_fallthru
        _
    $region6: #{tpu_custom_call.1} parent=1 // loop_footer
      %s18 = sadd.s32 1, %s14
    $region7: #{tpu_custom_call.1} parent=1 // loop_footer_branch
      %13 = sbr.rel target = $region3
    $region8: #{tpu_custom_call.1} parent=1 // loop_exit
      _
    %2028 = vsyncpa [#allocation3], 1
    %s2029 = scalar_lea.sflag [#allocation3], 1
    %2030 = vsyncpa %s2029, 1
    %2031 = vsyncpa [#allocation4], 1
    %s2032 = scalar_lea.sflag [#allocation4], 1
    %2033 = vsyncpa %s2032, 1

</llo_original>
